<compile_context>
chip_gen: v5e
topology: v5e:2x2
jax: 0.10.0
libtpu: 0.0.40
codegen_flags: <defaults>
</compile_context>

<pallas_src>
import functools
import math

import numpy as np
import jax
import jax.numpy as jnp
from jax.experimental import pallas as pl
from jax.experimental.pallas import tpu as pltpu


def _attn_kernel(q_ref, kt_ref, v_ref, mult_ref, *rest,
                 b_blk, n_heads, attn_ch, scale2, has_bias):
    """One batch block per grid step; all (batch, head) pairs unrolled statically.

    q_ref    : (b_blk, H, n_ctx, attn_ch)   bf16
    kt_ref   : (b_blk, H, attn_ch, n_ctx)   bf16 (K pre-transposed in the wrapper)
    v_ref    : (b_blk, H, n_ctx, attn_ch)   bf16
    mult_ref : (b_blk, H, n_ctx, n_ctx)     f32, = 1 + 0.2 * a[(b*H+h) % bs]
    bias_ref : (b_blk, 1, n_ctx)            f32 additive key bias (only if has_bias)
    o_ref    : (b_blk, n_ctx, H*attn_ch)    lane-dense output
    """
    if has_bias:
        bias_ref, o_ref = rest
    else:
        (o_ref,) = rest

    for bb in range(b_blk):                      # static unroll: tiny batch block
        for h in range(n_heads):                 # static unroll: n_heads tiny
            q = q_ref[bb, h]                     # (n_ctx, attn_ch) bf16
            kt = kt_ref[bb, h]                   # (attn_ch, n_ctx) bf16
            v = v_ref[bb, h]                     # (n_ctx, attn_ch) bf16

            # logits = (q*scale) @ (k*scale)^T == (q @ k^T) * scale^2, acc in f32
            s = jnp.dot(q, kt, preferred_element_type=jnp.float32) * scale2
            if has_bias:
                s = s + bias_ref[bb]             # (1, n_ctx) broadcast over queries

            # numerically-stable exp in f32 (softmax denom fused with the
            # attention_weights renormalization below)
            p = jnp.exp(s - jnp.max(s, axis=-1, keepdims=True))

            # softmax(s)*mult renormalized == p*mult / sum(p*mult)
            w = p * mult_ref[bb, h]              # f32 (n_ctx, n_ctx)
            denom = jnp.sum(w, axis=-1, keepdims=True)

            # TODO(synk): torch casts the weights to float16 before the
            # renormalization + PV matmul; bf16 is the TPU-native emulation of
            # that rounding and feeds the MXU directly.
            w_lo = w.astype(jnp.bfloat16)
            o_h = jnp.dot(w_lo, v, preferred_element_type=jnp.float32) / denom

            # per-head static lane-slice store (bounds live ranges, no concat)
            o_ref[bb, :, h * attn_ch:(h + 1) * attn_ch] = o_h.astype(o_ref.dtype)


def _pick_batch_block(bs, max_blk=8):
    """Largest divisor of bs that is <= max_blk (keeps per-step VMEM modest)."""
    blk = min(bs, max_blk)
    while bs % blk:
        blk -= 1
    return blk


def qkv_multihead_attention(qkv, n_heads, key_padding_mask=None,
                            attention_weights=None, batch_block=None):
    """JAX/Pallas port of QKVMultiheadAttention.forward (attention_weights path)."""
    bs, n_ctx, width = qkv.shape
    attn_ch = width // n_heads // 3
    scale2 = 1.0 / math.sqrt(attn_ch)            # (attn_ch ** -0.25) ** 2

    # Only the attention_weights branch returns a tensor in the torch module.
    assert attention_weights is not None, "attention_weights=None path returns None in torch"
    assert n_ctx == 10, "torch reshape hard-codes 10x10 attention maps"
    assert attention_weights.shape == (bs, n_ctx, n_ctx)

    if batch_block is None:
        batch_block = _pick_batch_block(bs)
    nb = bs // batch_block

    # bf16 MXU operands; per-head layout with lane offset 0 and K pre-transposed
    # so the kernel does no lane-offset slicing and no in-kernel transpose.
    qkv5 = qkv.astype(jnp.bfloat16).reshape(bs, n_ctx, n_heads, 3, attn_ch)
    q = jnp.transpose(qkv5[:, :, :, 0, :], (0, 2, 1, 3))   # (bs, H, n_ctx, attn_ch)
    kt = jnp.transpose(qkv5[:, :, :, 1, :], (0, 2, 3, 1))  # (bs, H, attn_ch, n_ctx)
    v = jnp.transpose(qkv5[:, :, :, 2, :], (0, 2, 1, 3))   # (bs, H, n_ctx, attn_ch)

    # torch: a.repeat(n_heads,1,1).reshape(bs, n_heads, 10, 10)
    #   -> element (b, h) comes from a[(b*n_heads + h) % bs].
    # Resolve the mapping statically in the wrapper and precompute 1 + 0.2*a,
    # so the kernel has zero dynamic indexing / modulo work and the input stays
    # batch-blocked (VMEM-flat for large bs).
    idx = (np.arange(bs)[:, None] * n_heads + np.arange(n_heads)[None, :]) % bs
    mult = (1.0 + 0.2 * attention_weights.astype(jnp.float32))[idx]  # (bs,H,10,10)

    inputs = [q, kt, v, mult]
    in_specs = [
        pl.BlockSpec((batch_block, n_heads, n_ctx, attn_ch), lambda b: (b, 0, 0, 0)),
        pl.BlockSpec((batch_block, n_heads, attn_ch, n_ctx), lambda b: (b, 0, 0, 0)),
        pl.BlockSpec((batch_block, n_heads, n_ctx, attn_ch), lambda b: (b, 0, 0, 0)),
        pl.BlockSpec((batch_block, n_heads, n_ctx, n_ctx), lambda b: (b, 0, 0, 0)),
    ]

    has_bias = key_padding_mask is not None
    if has_bias:
        # matches torch masked_fill(..., -inf); fully-masked key rows give NaN
        # exactly as in torch (documented contract).
        bias = jnp.where(key_padding_mask, -jnp.inf, 0.0).astype(jnp.float32)
        bias = bias.reshape(bs, 1, n_ctx)
        inputs.append(bias)
        in_specs.append(pl.BlockSpec((batch_block, 1, n_ctx), lambda b: (b, 0, 0)))

    kernel = functools.partial(
        _attn_kernel, b_blk=batch_block, n_heads=n_heads, attn_ch=attn_ch,
        scale2=scale2, has_bias=has_bias)

    out = pl.pallas_call(
        kernel,
        out_shape=jax.ShapeDtypeStruct((bs, n_ctx, n_heads * attn_ch), qkv.dtype),
        grid_spec=pltpu.PrefetchScalarGridSpec(
            num_scalar_prefetch=0,
            grid=(nb,),
            in_specs=in_specs,
            out_specs=pl.BlockSpec((batch_block, n_ctx, n_heads * attn_ch),
                                   lambda b: (b, 0, 0)),
        ),
        compiler_params=pltpu.CompilerParams(
            dimension_semantics=("parallel",)),
    )(*inputs)
    return out                                   # (bs, n_ctx, n_heads*attn_ch)


def _reference(qkv, n_heads, attention_weights, key_padding_mask=None):
    """Pure-JAX f32 reference mirroring the torch forward."""
    bs, n_ctx, width = qkv.shape
    attn_ch = width // n_heads // 3
    scale = 1.0 / math.sqrt(math.sqrt(attn_ch))
    qkv4 = qkv.reshape(bs, n_ctx, n_heads, 3 * attn_ch)
    q, k, v = qkv4[..., :attn_ch], qkv4[..., attn_ch:2 * attn_ch], qkv4[..., 2 * attn_ch:]
    w = jnp.einsum('bthc,bshc->bhts', q * scale, k * scale)
    if key_padding_mask is not None:
        w = jnp.where(key_padding_mask[:, None, None, :], -jnp.inf, w)
    w = jax.nn.softmax(w.astype(jnp.float32), axis=-1)
    idx = (jnp.arange(bs)[:, None] * n_heads + jnp.arange(n_heads)[None, :]) % bs
    aa = attention_weights[idx]
    w = w * (1.0 + 0.2 * aa)
    w = w / jnp.sum(w, axis=3, keepdims=True)
    return jnp.einsum('bhts,bshc->bthc', w, v).reshape(bs, n_ctx, -1)


if __name__ == "__main__":
    bs, n_heads, n_ctx, attn_ch = 2, 4, 10, 16      # n_ctx must be 10 (torch reshape)
    width = 3 * n_heads * attn_ch                   # 192

    key = jax.random.PRNGKey(0)
    k1, k2 = jax.random.split(key)
    qkv = jax.random.normal(k1, (bs, n_ctx, width), dtype=jnp.float32)
    attention_weights = jax.random.uniform(k2, (bs, n_ctx, n_ctx), dtype=jnp.float32)

    # Tolerance vs the all-f32 reference: the kernel feeds bf16 operands to the
    # MXU (the torch module itself casts the weights to fp16), so a ~1e-2-level
    # tolerance is the faithful comparison.
    TOL = 2e-2

    # 1) no key_padding_mask (bias-free kernel variant)
    out = qkv_multihead_attention(qkv, n_heads, attention_weights=attention_weights)
    out = jax.block_until_ready(out)
    ref = _reference(qkv, n_heads, attention_weights)
    assert out.shape == (bs, n_ctx, n_heads * attn_ch)
    assert jnp.allclose(out, ref, rtol=TOL, atol=TOL), "mismatch vs reference (no mask)"

    # 2) with a partial key_padding_mask (bias kernel variant; no fully-masked rows)
    mask = jnp.zeros((bs, n_ctx), dtype=bool).at[:, -2:].set(True)
    out_m = qkv_multihead_attention(qkv, n_heads, key_padding_mask=mask,
                                    attention_weights=attention_weights)
    out_m = jax.block_until_ready(out_m)
    ref_m = _reference(qkv, n_heads, attention_weights, key_padding_mask=mask)
    assert jnp.allclose(out_m, ref_m, rtol=TOL, atol=TOL), "mismatch vs reference (mask)"

    print("KERNEL_OK")
</pallas_src>

<mosaic_0001>
module attributes {stable_mosaic.version = 11 : i64} {
  func.func @_attn_kernel(%arg0: i32, %arg1: memref<2x4x10x16xbf16, #tpu.memory_space<vmem>>, %arg2: memref<2x4x16x10xbf16, #tpu.memory_space<vmem>>, %arg3: memref<2x4x10x16xbf16, #tpu.memory_space<vmem>>, %arg4: memref<2x4x10x10xf32, #tpu.memory_space<vmem>>, %arg5: memref<2x10x64xf32, #tpu.memory_space<vmem>>) attributes {dimension_semantics = [#tpu.dimension_semantics<parallel>], iteration_bounds = array<i64: 1>, scalar_prefetch = 0 : i64, scratch_operands = 0 : i64, tpu.core_type = #tpu.core_type<tc>, window_params = [{transform_indices = @transform_0, window_bounds = array<i64: 2, 4, 10, 16>}, {transform_indices = @transform_1, window_bounds = array<i64: 2, 4, 16, 10>}, {transform_indices = @transform_2, window_bounds = array<i64: 2, 4, 10, 16>}, {transform_indices = @transform_3, window_bounds = array<i64: 2, 4, 10, 10>}, {transform_indices = @transform_4, window_bounds = array<i64: 2, 10, 64>}]} {
    %c0 = arith.constant 0 : index
    %c0_0 = arith.constant 0 : index
    %c0_1 = arith.constant 0 : index
    %c0_2 = arith.constant 0 : index
    %0 = vector.load %arg1[%c0, %c0_0, %c0_1, %c0_2] : memref<2x4x10x16xbf16, #tpu.memory_space<vmem>>, vector<1x1x10x16xbf16>
    %1 = vector.shape_cast %0 : vector<1x1x10x16xbf16> to vector<10x16xbf16>
    %c0_3 = arith.constant 0 : index
    %c0_4 = arith.constant 0 : index
    %c0_5 = arith.constant 0 : index
    %c0_6 = arith.constant 0 : index
    %2 = vector.load %arg2[%c0_3, %c0_4, %c0_5, %c0_6] : memref<2x4x16x10xbf16, #tpu.memory_space<vmem>>, vector<1x1x16x10xbf16>
    %3 = vector.shape_cast %2 : vector<1x1x16x10xbf16> to vector<16x10xbf16>
    %c0_7 = arith.constant 0 : index
    %c0_8 = arith.constant 0 : index
    %c0_9 = arith.constant 0 : index
    %c0_10 = arith.constant 0 : index
    %4 = vector.load %arg3[%c0_7, %c0_8, %c0_9, %c0_10] : memref<2x4x10x16xbf16, #tpu.memory_space<vmem>>, vector<1x1x10x16xbf16>
    %5 = vector.shape_cast %4 : vector<1x1x10x16xbf16> to vector<10x16xbf16>
    %cst = arith.constant dense<0.000000e+00> : vector<10x10xf32>
    %6 = tpu.matmul %1, %3, %cst {dimension_numbers = #tpu.dot_dimension_numbers<[1], [0], [0], [1], [0, 0, 1, 1], [], []>} : vector<10x16xbf16>, vector<16x10xbf16>, vector<10x10xf32> -> vector<10x10xf32>
    %cst_11 = arith.constant 2.500000e-01 : f32
    %7 = vector.broadcast %cst_11 : f32 to vector<10x10xf32>
    %8 = arith.mulf %6, %7 : vector<10x10xf32>
    %cst_12 = arith.constant dense<0xFF800000> : vector<10xf32>
    %9 = vector.multi_reduction <maximumf>, %8, %cst_12 [1] : vector<10x10xf32> to vector<10xf32>
    %10 = vector.shape_cast %9 : vector<10xf32> to vector<10x1xf32>
    %11 = vector.broadcast %10 : vector<10x1xf32> to vector<10x10xf32>
    %12 = arith.subf %8, %11 : vector<10x10xf32>
    %13 = math.exp %12 : vector<10x10xf32>
    %c0_13 = arith.constant 0 : index
    %c0_14 = arith.constant 0 : index
    %c0_15 = arith.constant 0 : index
    %c0_16 = arith.constant 0 : index
    %14 = vector.load %arg4[%c0_13, %c0_14, %c0_15, %c0_16] : memref<2x4x10x10xf32, #tpu.memory_space<vmem>>, vector<1x1x10x10xf32>
    %15 = vector.shape_cast %14 : vector<1x1x10x10xf32> to vector<10x10xf32>
    %16 = arith.mulf %13, %15 : vector<10x10xf32>
    %cst_17 = arith.constant dense<0.000000e+00> : vector<10xf32>
    %17 = vector.multi_reduction <add>, %16, %cst_17 [1] : vector<10x10xf32> to vector<10xf32>
    %18 = vector.shape_cast %17 : vector<10xf32> to vector<10x1xf32>
    %19 = arith.truncf %16 : vector<10x10xf32> to vector<10x10xbf16>
    %cst_18 = arith.constant dense<0.000000e+00> : vector<10x16xf32>
    %20 = tpu.matmul %19, %5, %cst_18 {dimension_numbers = #tpu.dot_dimension_numbers<[1], [0], [0], [1], [0, 0, 1, 1], [], []>} : vector<10x10xbf16>, vector<10x16xbf16>, vector<10x16xf32> -> vector<10x16xf32>
    %21 = vector.broadcast %18 : vector<10x1xf32> to vector<10x16xf32>
    %22 = arith.divf %20, %21 : vector<10x16xf32>
    %c0_19 = arith.constant 0 : index
    %c0_20 = arith.constant 0 : index
    %c0_21 = arith.constant 0 : index
    %23 = vector.load %arg5[%c0_19, %c0_20, %c0_21] : memref<2x10x64xf32, #tpu.memory_space<vmem>>, vector<1x10x16xf32>
    %24 = vector.shape_cast %23 : vector<1x10x16xf32> to vector<10x16xf32>
    %25 = vector.shape_cast %22 : vector<10x16xf32> to vector<1x10x16xf32>
    tpu.vector_store %arg5[%c0_19, %c0_20, %c0_21], %25 {strides = array<i32>} : memref<2x10x64xf32, #tpu.memory_space<vmem>>, vector<1x10x16xf32>,
    %c0_22 = arith.constant 0 : index
    %c1 = arith.constant 1 : index
    %c0_23 = arith.constant 0 : index
    %c0_24 = arith.constant 0 : index
    %26 = vector.load %arg1[%c0_22, %c1, %c0_23, %c0_24] : memref<2x4x10x16xbf16, #tpu.memory_space<vmem>>, vector<1x1x10x16xbf16>
    %27 = vector.shape_cast %26 : vector<1x1x10x16xbf16> to vector<10x16xbf16>
    %c0_25 = arith.constant 0 : index
    %c1_26 = arith.constant 1 : index
    %c0_27 = arith.constant 0 : index
    %c0_28 = arith.constant 0 : index
    %28 = vector.load %arg2[%c0_25, %c1_26, %c0_27, %c0_28] : memref<2x4x16x10xbf16, #tpu.memory_space<vmem>>, vector<1x1x16x10xbf16>
    %29 = vector.shape_cast %28 : vector<1x1x16x10xbf16> to vector<16x10xbf16>
    %c0_29 = arith.constant 0 : index
    %c1_30 = arith.constant 1 : index
    %c0_31 = arith.constant 0 : index
    %c0_32 = arith.constant 0 : index
    %30 = vector.load %arg3[%c0_29, %c1_30, %c0_31, %c0_32] : memref<2x4x10x16xbf16, #tpu.memory_space<vmem>>, vector<1x1x10x16xbf16>
    %31 = vector.shape_cast %30 : vector<1x1x10x16xbf16> to vector<10x16xbf16>
    %cst_33 = arith.constant dense<0.000000e+00> : vector<10x10xf32>
    %32 = tpu.matmul %27, %29, %cst_33 {dimension_numbers = #tpu.dot_dimension_numbers<[1], [0], [0], [1], [0, 0, 1, 1], [], []>} : vector<10x16xbf16>, vector<16x10xbf16>, vector<10x10xf32> -> vector<10x10xf32>
    %cst_34 = arith.constant 2.500000e-01 : f32
    %33 = vector.broadcast %cst_34 : f32 to vector<10x10xf32>
    %34 = arith.mulf %32, %33 : vector<10x10xf32>
    %cst_35 = arith.constant dense<0xFF800000> : vector<10xf32>
    %35 = vector.multi_reduction <maximumf>, %34, %cst_35 [1] : vector<10x10xf32> to vector<10xf32>
    %36 = vector.shape_cast %35 : vector<10xf32> to vector<10x1xf32>
    %37 = vector.broadcast %36 : vector<10x1xf32> to vector<10x10xf32>
    %38 = arith.subf %34, %37 : vector<10x10xf32>
    %39 = math.exp %38 : vector<10x10xf32>
    %c0_36 = arith.constant 0 : index
    %c1_37 = arith.constant 1 : index
    %c0_38 = arith.constant 0 : index
    %c0_39 = arith.constant 0 : index
    %40 = vector.load %arg4[%c0_36, %c1_37, %c0_38, %c0_39] : memref<2x4x10x10xf32, #tpu.memory_space<vmem>>, vector<1x1x10x10xf32>
    %41 = vector.shape_cast %40 : vector<1x1x10x10xf32> to vector<10x10xf32>
    %42 = arith.mulf %39, %41 : vector<10x10xf32>
    %cst_40 = arith.constant dense<0.000000e+00> : vector<10xf32>
    %43 = vector.multi_reduction <add>, %42, %cst_40 [1] : vector<10x10xf32> to vector<10xf32>
    %44 = vector.shape_cast %43 : vector<10xf32> to vector<10x1xf32>
    %45 = arith.truncf %42 : vector<10x10xf32> to vector<10x10xbf16>
    %cst_41 = arith.constant dense<0.000000e+00> : vector<10x16xf32>
    %46 = tpu.matmul %45, %31, %cst_41 {dimension_numbers = #tpu.dot_dimension_numbers<[1], [0], [0], [1], [0, 0, 1, 1], [], []>} : vector<10x10xbf16>, vector<10x16xbf16>, vector<10x16xf32> -> vector<10x16xf32>
    %47 = vector.broadcast %44 : vector<10x1xf32> to vector<10x16xf32>
    %48 = arith.divf %46, %47 : vector<10x16xf32>
    %c0_42 = arith.constant 0 : index
    %c0_43 = arith.constant 0 : index
    %c16 = arith.constant 16 : index
    %49 = vector.load %arg5[%c0_42, %c0_43, %c16] : memref<2x10x64xf32, #tpu.memory_space<vmem>>, vector<1x10x16xf32>
    %50 = vector.shape_cast %49 : vector<1x10x16xf32> to vector<10x16xf32>
    %51 = vector.shape_cast %48 : vector<10x16xf32> to vector<1x10x16xf32>
    tpu.vector_store %arg5[%c0_42, %c0_43, %c16], %51 {strides = array<i32>} : memref<2x10x64xf32, #tpu.memory_space<vmem>>, vector<1x10x16xf32>,
    %c0_44 = arith.constant 0 : index
    %c2 = arith.constant 2 : index
    %c0_45 = arith.constant 0 : index
    %c0_46 = arith.constant 0 : index
    %52 = vector.load %arg1[%c0_44, %c2, %c0_45, %c0_46] : memref<2x4x10x16xbf16, #tpu.memory_space<vmem>>, vector<1x1x10x16xbf16>
    %53 = vector.shape_cast %52 : vector<1x1x10x16xbf16> to vector<10x16xbf16>
    %c0_47 = arith.constant 0 : index
    %c2_48 = arith.constant 2 : index
    %c0_49 = arith.constant 0 : index
    %c0_50 = arith.constant 0 : index
    %54 = vector.load %arg2[%c0_47, %c2_48, %c0_49, %c0_50] : memref<2x4x16x10xbf16, #tpu.memory_space<vmem>>, vector<1x1x16x10xbf16>
    %55 = vector.shape_cast %54 : vector<1x1x16x10xbf16> to vector<16x10xbf16>
    %c0_51 = arith.constant 0 : index
    %c2_52 = arith.constant 2 : index
    %c0_53 = arith.constant 0 : index
    %c0_54 = arith.constant 0 : index
    %56 = vector.load %arg3[%c0_51, %c2_52, %c0_53, %c0_54] : memref<2x4x10x16xbf16, #tpu.memory_space<vmem>>, vector<1x1x10x16xbf16>
    %57 = vector.shape_cast %56 : vector<1x1x10x16xbf16> to vector<10x16xbf16>
    %cst_55 = arith.constant dense<0.000000e+00> : vector<10x10xf32>
    %58 = tpu.matmul %53, %55, %cst_55 {dimension_numbers = #tpu.dot_dimension_numbers<[1], [0], [0], [1], [0, 0, 1, 1], [], []>} : vector<10x16xbf16>, vector<16x10xbf16>, vector<10x10xf32> -> vector<10x10xf32>
    %cst_56 = arith.constant 2.500000e-01 : f32
    %59 = vector.broadcast %cst_56 : f32 to vector<10x10xf32>
    %60 = arith.mulf %58, %59 : vector<10x10xf32>
    %cst_57 = arith.constant dense<0xFF800000> : vector<10xf32>
    %61 = vector.multi_reduction <maximumf>, %60, %cst_57 [1] : vector<10x10xf32> to vector<10xf32>
    %62 = vector.shape_cast %61 : vector<10xf32> to vector<10x1xf32>
    %63 = vector.broadcast %62 : vector<10x1xf32> to vector<10x10xf32>
    %64 = arith.subf %60, %63 : vector<10x10xf32>
    %65 = math.exp %64 : vector<10x10xf32>
    %c0_58 = arith.constant 0 : index
    %c2_59 = arith.constant 2 : index
    %c0_60 = arith.constant 0 : index
    %c0_61 = arith.constant 0 : index
    %66 = vector.load %arg4[%c0_58, %c2_59, %c0_60, %c0_61] : memref<2x4x10x10xf32, #tpu.memory_space<vmem>>, vector<1x1x10x10xf32>
    %67 = vector.shape_cast %66 : vector<1x1x10x10xf32> to vector<10x10xf32>
    %68 = arith.mulf %65, %67 : vector<10x10xf32>
    %cst_62 = arith.constant dense<0.000000e+00> : vector<10xf32>
    %69 = vector.multi_reduction <add>, %68, %cst_62 [1] : vector<10x10xf32> to vector<10xf32>
    %70 = vector.shape_cast %69 : vector<10xf32> to vector<10x1xf32>
    %71 = arith.truncf %68 : vector<10x10xf32> to vector<10x10xbf16>
    %cst_63 = arith.constant dense<0.000000e+00> : vector<10x16xf32>
    %72 = tpu.matmul %71, %57, %cst_63 {dimension_numbers = #tpu.dot_dimension_numbers<[1], [0], [0], [1], [0, 0, 1, 1], [], []>} : vector<10x10xbf16>, vector<10x16xbf16>, vector<10x16xf32> -> vector<10x16xf32>
    %73 = vector.broadcast %70 : vector<10x1xf32> to vector<10x16xf32>
    %74 = arith.divf %72, %73 : vector<10x16xf32>
    %c0_64 = arith.constant 0 : index
    %c0_65 = arith.constant 0 : index
    %c32 = arith.constant 32 : index
    %75 = vector.load %arg5[%c0_64, %c0_65, %c32] : memref<2x10x64xf32, #tpu.memory_space<vmem>>, vector<1x10x16xf32>
    %76 = vector.shape_cast %75 : vector<1x10x16xf32> to vector<10x16xf32>
    %77 = vector.shape_cast %74 : vector<10x16xf32> to vector<1x10x16xf32>
    tpu.vector_store %arg5[%c0_64, %c0_65, %c32], %77 {strides = array<i32>} : memref<2x10x64xf32, #tpu.memory_space<vmem>>, vector<1x10x16xf32>,
    %c0_66 = arith.constant 0 : index
    %c3 = arith.constant 3 : index
    %c0_67 = arith.constant 0 : index
    %c0_68 = arith.constant 0 : index
    %78 = vector.load %arg1[%c0_66, %c3, %c0_67, %c0_68] : memref<2x4x10x16xbf16, #tpu.memory_space<vmem>>, vector<1x1x10x16xbf16>
    %79 = vector.shape_cast %78 : vector<1x1x10x16xbf16> to vector<10x16xbf16>
    %c0_69 = arith.constant 0 : index
    %c3_70 = arith.constant 3 : index
    %c0_71 = arith.constant 0 : index
    %c0_72 = arith.constant 0 : index
    %80 = vector.load %arg2[%c0_69, %c3_70, %c0_71, %c0_72] : memref<2x4x16x10xbf16, #tpu.memory_space<vmem>>, vector<1x1x16x10xbf16>
    %81 = vector.shape_cast %80 : vector<1x1x16x10xbf16> to vector<16x10xbf16>
    %c0_73 = arith.constant 0 : index
    %c3_74 = arith.constant 3 : index
    %c0_75 = arith.constant 0 : index
    %c0_76 = arith.constant 0 : index
    %82 = vector.load %arg3[%c0_73, %c3_74, %c0_75, %c0_76] : memref<2x4x10x16xbf16, #tpu.memory_space<vmem>>, vector<1x1x10x16xbf16>
    %83 = vector.shape_cast %82 : vector<1x1x10x16xbf16> to vector<10x16xbf16>
    %cst_77 = arith.constant dense<0.000000e+00> : vector<10x10xf32>
    %84 = tpu.matmul %79, %81, %cst_77 {dimension_numbers = #tpu.dot_dimension_numbers<[1], [0], [0], [1], [0, 0, 1, 1], [], []>} : vector<10x16xbf16>, vector<16x10xbf16>, vector<10x10xf32> -> vector<10x10xf32>
    %cst_78 = arith.constant 2.500000e-01 : f32
    %85 = vector.broadcast %cst_78 : f32 to vector<10x10xf32>
    %86 = arith.mulf %84, %85 : vector<10x10xf32>
    %cst_79 = arith.constant dense<0xFF800000> : vector<10xf32>
    %87 = vector.multi_reduction <maximumf>, %86, %cst_79 [1] : vector<10x10xf32> to vector<10xf32>
    %88 = vector.shape_cast %87 : vector<10xf32> to vector<10x1xf32>
    %89 = vector.broadcast %88 : vector<10x1xf32> to vector<10x10xf32>
    %90 = arith.subf %86, %89 : vector<10x10xf32>
    %91 = math.exp %90 : vector<10x10xf32>
    %c0_80 = arith.constant 0 : index
    %c3_81 = arith.constant 3 : index
    %c0_82 = arith.constant 0 : index
    %c0_83 = arith.constant 0 : index
    %92 = vector.load %arg4[%c0_80, %c3_81, %c0_82, %c0_83] : memref<2x4x10x10xf32, #tpu.memory_space<vmem>>, vector<1x1x10x10xf32>
    %93 = vector.shape_cast %92 : vector<1x1x10x10xf32> to vector<10x10xf32>
    %94 = arith.mulf %91, %93 : vector<10x10xf32>
    %cst_84 = arith.constant dense<0.000000e+00> : vector<10xf32>
    %95 = vector.multi_reduction <add>, %94, %cst_84 [1] : vector<10x10xf32> to vector<10xf32>
    %96 = vector.shape_cast %95 : vector<10xf32> to vector<10x1xf32>
    %97 = arith.truncf %94 : vector<10x10xf32> to vector<10x10xbf16>
    %cst_85 = arith.constant dense<0.000000e+00> : vector<10x16xf32>
    %98 = tpu.matmul %97, %83, %cst_85 {dimension_numbers = #tpu.dot_dimension_numbers<[1], [0], [0], [1], [0, 0, 1, 1], [], []>} : vector<10x10xbf16>, vector<10x16xbf16>, vector<10x16xf32> -> vector<10x16xf32>
    %99 = vector.broadcast %96 : vector<10x1xf32> to vector<10x16xf32>
    %100 = arith.divf %98, %99 : vector<10x16xf32>
    %c0_86 = arith.constant 0 : index
    %c0_87 = arith.constant 0 : index
    %c48 = arith.constant 48 : index
    %101 = vector.load %arg5[%c0_86, %c0_87, %c48] : memref<2x10x64xf32, #tpu.memory_space<vmem>>, vector<1x10x16xf32>
    %102 = vector.shape_cast %101 : vector<1x10x16xf32> to vector<10x16xf32>
    %103 = vector.shape_cast %100 : vector<10x16xf32> to vector<1x10x16xf32>
    tpu.vector_store %arg5[%c0_86, %c0_87, %c48], %103 {strides = array<i32>} : memref<2x10x64xf32, #tpu.memory_space<vmem>>, vector<1x10x16xf32>,
    %c1_88 = arith.constant 1 : index
    %c0_89 = arith.constant 0 : index
    %c0_90 = arith.constant 0 : index
    %c0_91 = arith.constant 0 : index
    %104 = vector.load %arg1[%c1_88, %c0_89, %c0_90, %c0_91] : memref<2x4x10x16xbf16, #tpu.memory_space<vmem>>, vector<1x1x10x16xbf16>
    %105 = vector.shape_cast %104 : vector<1x1x10x16xbf16> to vector<10x16xbf16>
    %c1_92 = arith.constant 1 : index
    %c0_93 = arith.constant 0 : index
    %c0_94 = arith.constant 0 : index
    %c0_95 = arith.constant 0 : index
    %106 = vector.load %arg2[%c1_92, %c0_93, %c0_94, %c0_95] : memref<2x4x16x10xbf16, #tpu.memory_space<vmem>>, vector<1x1x16x10xbf16>
    %107 = vector.shape_cast %106 : vector<1x1x16x10xbf16> to vector<16x10xbf16>
    %c1_96 = arith.constant 1 : index
    %c0_97 = arith.constant 0 : index
    %c0_98 = arith.constant 0 : index
    %c0_99 = arith.constant 0 : index
    %108 = vector.load %arg3[%c1_96, %c0_97, %c0_98, %c0_99] : memref<2x4x10x16xbf16, #tpu.memory_space<vmem>>, vector<1x1x10x16xbf16>
    %109 = vector.shape_cast %108 : vector<1x1x10x16xbf16> to vector<10x16xbf16>
    %cst_100 = arith.constant dense<0.000000e+00> : vector<10x10xf32>
    %110 = tpu.matmul %105, %107, %cst_100 {dimension_numbers = #tpu.dot_dimension_numbers<[1], [0], [0], [1], [0, 0, 1, 1], [], []>} : vector<10x16xbf16>, vector<16x10xbf16>, vector<10x10xf32> -> vector<10x10xf32>
    %cst_101 = arith.constant 2.500000e-01 : f32
    %111 = vector.broadcast %cst_101 : f32 to vector<10x10xf32>
    %112 = arith.mulf %110, %111 : vector<10x10xf32>
    %cst_102 = arith.constant dense<0xFF800000> : vector<10xf32>
    %113 = vector.multi_reduction <maximumf>, %112, %cst_102 [1] : vector<10x10xf32> to vector<10xf32>
    %114 = vector.shape_cast %113 : vector<10xf32> to vector<10x1xf32>
    %115 = vector.broadcast %114 : vector<10x1xf32> to vector<10x10xf32>
    %116 = arith.subf %112, %115 : vector<10x10xf32>
    %117 = math.exp %116 : vector<10x10xf32>
    %c1_103 = arith.constant 1 : index
    %c0_104 = arith.constant 0 : index
    %c0_105 = arith.constant 0 : index
    %c0_106 = arith.constant 0 : index
    %118 = vector.load %arg4[%c1_103, %c0_104, %c0_105, %c0_106] : memref<2x4x10x10xf32, #tpu.memory_space<vmem>>, vector<1x1x10x10xf32>
    %119 = vector.shape_cast %118 : vector<1x1x10x10xf32> to vector<10x10xf32>
    %120 = arith.mulf %117, %119 : vector<10x10xf32>
    %cst_107 = arith.constant dense<0.000000e+00> : vector<10xf32>
    %121 = vector.multi_reduction <add>, %120, %cst_107 [1] : vector<10x10xf32> to vector<10xf32>
    %122 = vector.shape_cast %121 : vector<10xf32> to vector<10x1xf32>
    %123 = arith.truncf %120 : vector<10x10xf32> to vector<10x10xbf16>
    %cst_108 = arith.constant dense<0.000000e+00> : vector<10x16xf32>
    %124 = tpu.matmul %123, %109, %cst_108 {dimension_numbers = #tpu.dot_dimension_numbers<[1], [0], [0], [1], [0, 0, 1, 1], [], []>} : vector<10x10xbf16>, vector<10x16xbf16>, vector<10x16xf32> -> vector<10x16xf32>
    %125 = vector.broadcast %122 : vector<10x1xf32> to vector<10x16xf32>
    %126 = arith.divf %124, %125 : vector<10x16xf32>
    %c1_109 = arith.constant 1 : index
    %c0_110 = arith.constant 0 : index
    %c0_111 = arith.constant 0 : index
    %127 = vector.load %arg5[%c1_109, %c0_110, %c0_111] : memref<2x10x64xf32, #tpu.memory_space<vmem>>, vector<1x10x16xf32>
    %128 = vector.shape_cast %127 : vector<1x10x16xf32> to vector<10x16xf32>
    %129 = vector.shape_cast %126 : vector<10x16xf32> to vector<1x10x16xf32>
    tpu.vector_store %arg5[%c1_109, %c0_110, %c0_111], %129 {strides = array<i32>} : memref<2x10x64xf32, #tpu.memory_space<vmem>>, vector<1x10x16xf32>,
    %c1_112 = arith.constant 1 : index
    %c1_113 = arith.constant 1 : index
    %c0_114 = arith.constant 0 : index
    %c0_115 = arith.constant 0 : index
    %130 = vector.load %arg1[%c1_112, %c1_113, %c0_114, %c0_115] : memref<2x4x10x16xbf16, #tpu.memory_space<vmem>>, vector<1x1x10x16xbf16>
    %131 = vector.shape_cast %130 : vector<1x1x10x16xbf16> to vector<10x16xbf16>
    %c1_116 = arith.constant 1 : index
    %c1_117 = arith.constant 1 : index
    %c0_118 = arith.constant 0 : index
    %c0_119 = arith.constant 0 : index
    %132 = vector.load %arg2[%c1_116, %c1_117, %c0_118, %c0_119] : memref<2x4x16x10xbf16, #tpu.memory_space<vmem>>, vector<1x1x16x10xbf16>
    %133 = vector.shape_cast %132 : vector<1x1x16x10xbf16> to vector<16x10xbf16>
    %c1_120 = arith.constant 1 : index
    %c1_121 = arith.constant 1 : index
    %c0_122 = arith.constant 0 : index
    %c0_123 = arith.constant 0 : index
    %134 = vector.load %arg3[%c1_120, %c1_121, %c0_122, %c0_123] : memref<2x4x10x16xbf16, #tpu.memory_space<vmem>>, vector<1x1x10x16xbf16>
    %135 = vector.shape_cast %134 : vector<1x1x10x16xbf16> to vector<10x16xbf16>
    %cst_124 = arith.constant dense<0.000000e+00> : vector<10x10xf32>
    %136 = tpu.matmul %131, %133, %cst_124 {dimension_numbers = #tpu.dot_dimension_numbers<[1], [0], [0], [1], [0, 0, 1, 1], [], []>} : vector<10x16xbf16>, vector<16x10xbf16>, vector<10x10xf32> -> vector<10x10xf32>
    %cst_125 = arith.constant 2.500000e-01 : f32
    %137 = vector.broadcast %cst_125 : f32 to vector<10x10xf32>
    %138 = arith.mulf %136, %137 : vector<10x10xf32>
    %cst_126 = arith.constant dense<0xFF800000> : vector<10xf32>
    %139 = vector.multi_reduction <maximumf>, %138, %cst_126 [1] : vector<10x10xf32> to vector<10xf32>
    %140 = vector.shape_cast %139 : vector<10xf32> to vector<10x1xf32>
    %141 = vector.broadcast %140 : vector<10x1xf32> to vector<10x10xf32>
    %142 = arith.subf %138, %141 : vector<10x10xf32>
    %143 = math.exp %142 : vector<10x10xf32>
    %c1_127 = arith.constant 1 : index
    %c1_128 = arith.constant 1 : index
    %c0_129 = arith.constant 0 : index
    %c0_130 = arith.constant 0 : index
    %144 = vector.load %arg4[%c1_127, %c1_128, %c0_129, %c0_130] : memref<2x4x10x10xf32, #tpu.memory_space<vmem>>, vector<1x1x10x10xf32>
    %145 = vector.shape_cast %144 : vector<1x1x10x10xf32> to vector<10x10xf32>
    %146 = arith.mulf %143, %145 : vector<10x10xf32>
    %cst_131 = arith.constant dense<0.000000e+00> : vector<10xf32>
    %147 = vector.multi_reduction <add>, %146, %cst_131 [1] : vector<10x10xf32> to vector<10xf32>
    %148 = vector.shape_cast %147 : vector<10xf32> to vector<10x1xf32>
    %149 = arith.truncf %146 : vector<10x10xf32> to vector<10x10xbf16>
    %cst_132 = arith.constant dense<0.000000e+00> : vector<10x16xf32>
    %150 = tpu.matmul %149, %135, %cst_132 {dimension_numbers = #tpu.dot_dimension_numbers<[1], [0], [0], [1], [0, 0, 1, 1], [], []>} : vector<10x10xbf16>, vector<10x16xbf16>, vector<10x16xf32> -> vector<10x16xf32>
    %151 = vector.broadcast %148 : vector<10x1xf32> to vector<10x16xf32>
    %152 = arith.divf %150, %151 : vector<10x16xf32>
    %c1_133 = arith.constant 1 : index
    %c0_134 = arith.constant 0 : index
    %c16_135 = arith.constant 16 : index
    %153 = vector.load %arg5[%c1_133, %c0_134, %c16_135] : memref<2x10x64xf32, #tpu.memory_space<vmem>>, vector<1x10x16xf32>
    %154 = vector.shape_cast %153 : vector<1x10x16xf32> to vector<10x16xf32>
    %155 = vector.shape_cast %152 : vector<10x16xf32> to vector<1x10x16xf32>
    tpu.vector_store %arg5[%c1_133, %c0_134, %c16_135], %155 {strides = array<i32>} : memref<2x10x64xf32, #tpu.memory_space<vmem>>, vector<1x10x16xf32>,
    %c1_136 = arith.constant 1 : index
    %c2_137 = arith.constant 2 : index
    %c0_138 = arith.constant 0 : index
    %c0_139 = arith.constant 0 : index
    %156 = vector.load %arg1[%c1_136, %c2_137, %c0_138, %c0_139] : memref<2x4x10x16xbf16, #tpu.memory_space<vmem>>, vector<1x1x10x16xbf16>
    %157 = vector.shape_cast %156 : vector<1x1x10x16xbf16> to vector<10x16xbf16>
    %c1_140 = arith.constant 1 : index
    %c2_141 = arith.constant 2 : index
    %c0_142 = arith.constant 0 : index
    %c0_143 = arith.constant 0 : index
    %158 = vector.load %arg2[%c1_140, %c2_141, %c0_142, %c0_143] : memref<2x4x16x10xbf16, #tpu.memory_space<vmem>>, vector<1x1x16x10xbf16>
    %159 = vector.shape_cast %158 : vector<1x1x16x10xbf16> to vector<16x10xbf16>
    %c1_144 = arith.constant 1 : index
    %c2_145 = arith.constant 2 : index
    %c0_146 = arith.constant 0 : index
    %c0_147 = arith.constant 0 : index
    %160 = vector.load %arg3[%c1_144, %c2_145, %c0_146, %c0_147] : memref<2x4x10x16xbf16, #tpu.memory_space<vmem>>, vector<1x1x10x16xbf16>
    %161 = vector.shape_cast %160 : vector<1x1x10x16xbf16> to vector<10x16xbf16>
    %cst_148 = arith.constant dense<0.000000e+00> : vector<10x10xf32>
    %162 = tpu.matmul %157, %159, %cst_148 {dimension_numbers = #tpu.dot_dimension_numbers<[1], [0], [0], [1], [0, 0, 1, 1], [], []>} : vector<10x16xbf16>, vector<16x10xbf16>, vector<10x10xf32> -> vector<10x10xf32>
    %cst_149 = arith.constant 2.500000e-01 : f32
    %163 = vector.broadcast %cst_149 : f32 to vector<10x10xf32>
    %164 = arith.mulf %162, %163 : vector<10x10xf32>
    %cst_150 = arith.constant dense<0xFF800000> : vector<10xf32>
    %165 = vector.multi_reduction <maximumf>, %164, %cst_150 [1] : vector<10x10xf32> to vector<10xf32>
    %166 = vector.shape_cast %165 : vector<10xf32> to vector<10x1xf32>
    %167 = vector.broadcast %166 : vector<10x1xf32> to vector<10x10xf32>
    %168 = arith.subf %164, %167 : vector<10x10xf32>
    %169 = math.exp %168 : vector<10x10xf32>
    %c1_151 = arith.constant 1 : index
    %c2_152 = arith.constant 2 : index
    %c0_153 = arith.constant 0 : index
    %c0_154 = arith.constant 0 : index
    %170 = vector.load %arg4[%c1_151, %c2_152, %c0_153, %c0_154] : memref<2x4x10x10xf32, #tpu.memory_space<vmem>>, vector<1x1x10x10xf32>
    %171 = vector.shape_cast %170 : vector<1x1x10x10xf32> to vector<10x10xf32>
    %172 = arith.mulf %169, %171 : vector<10x10xf32>
    %cst_155 = arith.constant dense<0.000000e+00> : vector<10xf32>
    %173 = vector.multi_reduction <add>, %172, %cst_155 [1] : vector<10x10xf32> to vector<10xf32>
    %174 = vector.shape_cast %173 : vector<10xf32> to vector<10x1xf32>
    %175 = arith.truncf %172 : vector<10x10xf32> to vector<10x10xbf16>
    %cst_156 = arith.constant dense<0.000000e+00> : vector<10x16xf32>
    %176 = tpu.matmul %175, %161, %cst_156 {dimension_numbers = #tpu.dot_dimension_numbers<[1], [0], [0], [1], [0, 0, 1, 1], [], []>} : vector<10x10xbf16>, vector<10x16xbf16>, vector<10x16xf32> -> vector<10x16xf32>
    %177 = vector.broadcast %174 : vector<10x1xf32> to vector<10x16xf32>
    %178 = arith.divf %176, %177 : vector<10x16xf32>
    %c1_157 = arith.constant 1 : index
    %c0_158 = arith.constant 0 : index
    %c32_159 = arith.constant 32 : index
    %179 = vector.load %arg5[%c1_157, %c0_158, %c32_159] : memref<2x10x64xf32, #tpu.memory_space<vmem>>, vector<1x10x16xf32>
    %180 = vector.shape_cast %179 : vector<1x10x16xf32> to vector<10x16xf32>
    %181 = vector.shape_cast %178 : vector<10x16xf32> to vector<1x10x16xf32>
    tpu.vector_store %arg5[%c1_157, %c0_158, %c32_159], %181 {strides = array<i32>} : memref<2x10x64xf32, #tpu.memory_space<vmem>>, vector<1x10x16xf32>,
    %c1_160 = arith.constant 1 : index
    %c3_161 = arith.constant 3 : index
    %c0_162 = arith.constant 0 : index
    %c0_163 = arith.constant 0 : index
    %182 = vector.load %arg1[%c1_160, %c3_161, %c0_162, %c0_163] : memref<2x4x10x16xbf16, #tpu.memory_space<vmem>>, vector<1x1x10x16xbf16>
    %183 = vector.shape_cast %182 : vector<1x1x10x16xbf16> to vector<10x16xbf16>
    %c1_164 = arith.constant 1 : index
    %c3_165 = arith.constant 3 : index
    %c0_166 = arith.constant 0 : index
    %c0_167 = arith.constant 0 : index
    %184 = vector.load %arg2[%c1_164, %c3_165, %c0_166, %c0_167] : memref<2x4x16x10xbf16, #tpu.memory_space<vmem>>, vector<1x1x16x10xbf16>
    %185 = vector.shape_cast %184 : vector<1x1x16x10xbf16> to vector<16x10xbf16>
    %c1_168 = arith.constant 1 : index
    %c3_169 = arith.constant 3 : index
    %c0_170 = arith.constant 0 : index
    %c0_171 = arith.constant 0 : index
    %186 = vector.load %arg3[%c1_168, %c3_169, %c0_170, %c0_171] : memref<2x4x10x16xbf16, #tpu.memory_space<vmem>>, vector<1x1x10x16xbf16>
    %187 = vector.shape_cast %186 : vector<1x1x10x16xbf16> to vector<10x16xbf16>
    %cst_172 = arith.constant dense<0.000000e+00> : vector<10x10xf32>
    %188 = tpu.matmul %183, %185, %cst_172 {dimension_numbers = #tpu.dot_dimension_numbers<[1], [0], [0], [1], [0, 0, 1, 1], [], []>} : vector<10x16xbf16>, vector<16x10xbf16>, vector<10x10xf32> -> vector<10x10xf32>
    %cst_173 = arith.constant 2.500000e-01 : f32
    %189 = vector.broadcast %cst_173 : f32 to vector<10x10xf32>
    %190 = arith.mulf %188, %189 : vector<10x10xf32>
    %cst_174 = arith.constant dense<0xFF800000> : vector<10xf32>
    %191 = vector.multi_reduction <maximumf>, %190, %cst_174 [1] : vector<10x10xf32> to vector<10xf32>
    %192 = vector.shape_cast %191 : vector<10xf32> to vector<10x1xf32>
    %193 = vector.broadcast %192 : vector<10x1xf32> to vector<10x10xf32>
    %194 = arith.subf %190, %193 : vector<10x10xf32>
    %195 = math.exp %194 : vector<10x10xf32>
    %c1_175 = arith.constant 1 : index
    %c3_176 = arith.constant 3 : index
    %c0_177 = arith.constant 0 : index
    %c0_178 = arith.constant 0 : index
    %196 = vector.load %arg4[%c1_175, %c3_176, %c0_177, %c0_178] : memref<2x4x10x10xf32, #tpu.memory_space<vmem>>, vector<1x1x10x10xf32>
    %197 = vector.shape_cast %196 : vector<1x1x10x10xf32> to vector<10x10xf32>
    %198 = arith.mulf %195, %197 : vector<10x10xf32>
    %cst_179 = arith.constant dense<0.000000e+00> : vector<10xf32>
    %199 = vector.multi_reduction <add>, %198, %cst_179 [1] : vector<10x10xf32> to vector<10xf32>
    %200 = vector.shape_cast %199 : vector<10xf32> to vector<10x1xf32>
    %201 = arith.truncf %198 : vector<10x10xf32> to vector<10x10xbf16>
    %cst_180 = arith.constant dense<0.000000e+00> : vector<10x16xf32>
    %202 = tpu.matmul %201, %187, %cst_180 {dimension_numbers = #tpu.dot_dimension_numbers<[1], [0], [0], [1], [0, 0, 1, 1], [], []>} : vector<10x10xbf16>, vector<10x16xbf16>, vector<10x16xf32> -> vector<10x16xf32>
    %203 = vector.broadcast %200 : vector<10x1xf32> to vector<10x16xf32>
    %204 = arith.divf %202, %203 : vector<10x16xf32>
    %c1_181 = arith.constant 1 : index
    %c0_182 = arith.constant 0 : index
    %c48_183 = arith.constant 48 : index
    %205 = vector.load %arg5[%c1_181, %c0_182, %c48_183] : memref<2x10x64xf32, #tpu.memory_space<vmem>>, vector<1x10x16xf32>
    %206 = vector.shape_cast %205 : vector<1x10x16xf32> to vector<10x16xf32>
    %207 = vector.shape_cast %204 : vector<10x16xf32> to vector<1x10x16xf32>
    tpu.vector_store %arg5[%c1_181, %c0_182, %c48_183], %207 {strides = array<i32>} : memref<2x10x64xf32, #tpu.memory_space<vmem>>, vector<1x10x16xf32>,
    return
  }
  func.func @transform_0(%arg0: i32) -> (i32, i32, i32, i32) {
    %c0_i32 = arith.constant 0 : i32
    %c0_i32_0 = arith.constant 0 : i32
    %c0_i32_1 = arith.constant 0 : i32
    %c0_i32_2 = arith.constant 0 : i32
    return %arg0, %c0_i32, %c0_i32_0, %c0_i32_1 : i32, i32, i32, i32
  }
  func.func @transform_1(%arg0: i32) -> (i32, i32, i32, i32) {
    %c0_i32 = arith.constant 0 : i32
    %c0_i32_0 = arith.constant 0 : i32
    %c0_i32_1 = arith.constant 0 : i32
    %c0_i32_2 = arith.constant 0 : i32
    return %arg0, %c0_i32, %c0_i32_0, %c0_i32_1 : i32, i32, i32, i32
  }
  func.func @transform_2(%arg0: i32) -> (i32, i32, i32, i32) {
    %c0_i32 = arith.constant 0 : i32
    %c0_i32_0 = arith.constant 0 : i32
    %c0_i32_1 = arith.constant 0 : i32
    %c0_i32_2 = arith.constant 0 : i32
    return %arg0, %c0_i32, %c0_i32_0, %c0_i32_1 : i32, i32, i32, i32
  }
  func.func @transform_3(%arg0: i32) -> (i32, i32, i32, i32) {
    %c0_i32 = arith.constant 0 : i32
    %c0_i32_0 = arith.constant 0 : i32
    %c0_i32_1 = arith.constant 0 : i32
    %c0_i32_2 = arith.constant 0 : i32
    return %arg0, %c0_i32, %c0_i32_0, %c0_i32_1 : i32, i32, i32, i32
  }
  func.func @transform_4(%arg0: i32) -> (i32, i32, i32) {
    %c0_i32 = arith.constant 0 : i32
    %c0_i32_0 = arith.constant 0 : i32
    %c0_i32_1 = arith.constant 0 : i32
    return %arg0, %c0_i32, %c0_i32_0 : i32, i32, i32
  }
}

</mosaic_0001>

<llo_original>
// kernel: tpu_custom_call.1
$region0: #{tpu_custom_call.1}
  #allocation0 [shape = 'u32[]', space=smem, size = 0x4, offset = 0x4, fixed_abs, tag = 'smem constant byte address 0x4 - core index']
  #allocation1 [shape = 'u32[72,128]{1,0:T(1,128)}', space=vmem, size = 0x9000, scoped, tag = 'internal scratch']
  %s0 = inlined_call_operand.vmem [shape: bf16[2,4,10,16], index: 0, kind: input, shape index: {}]
  %s1 = inlined_call_operand.vmem [shape: bf16[2,4,16,10], index: 1, kind: input, shape index: {}]
  %s2 = inlined_call_operand.vmem [shape: bf16[2,4,10,16], index: 2, kind: input, shape index: {}]
  %s3 = inlined_call_operand.vmem [shape: f32[2,4,10,10], index: 3, kind: input, shape index: {}]
  %s4 = inlined_call_operand.vmem [shape: f32[2,10,64], index: 4, kind: output, shape index: {}]
  %s5 = sld [smem:[#allocation0]]
  $region26: #{tpu_custom_call.1} parent=0
    _
  %s7 = ssub.s32 1, %s5
  %s8 = scalar_select 0, %s7, %s5
  // Predicated region
  $region2: #{tpu_custom_call.1} parent=0 // pred_check
    _
  $region3: #{tpu_custom_call.1} parent=0 // pred_check_branch
    %10 = sbr.rel (0) target = $region5
  $region4: #{tpu_custom_call.1} parent=0 // pred_region
    _
  $region5: #{tpu_custom_call.1} parent=0 // pred_fallthru
    _
  // Predicated region
  $region6: #{tpu_custom_call.1} parent=0 // pred_check
    _
  $region7: #{tpu_custom_call.1} parent=0 // pred_check_branch
    %12 = sbr.rel (0) target = $region9
  $region8: #{tpu_custom_call.1} parent=0 // pred_region
    _
  $region9: #{tpu_custom_call.1} parent=0 // pred_fallthru
    _
  // Predicated region
  $region10: #{tpu_custom_call.1} parent=0 // pred_check
    _
  $region11: #{tpu_custom_call.1} parent=0 // pred_check_branch
    %14 = sbr.rel (0) target = $region13
  $region12: #{tpu_custom_call.1} parent=0 // pred_region
    _
  $region13: #{tpu_custom_call.1} parent=0 // pred_fallthru
    _
  // Predicated region
  $region14: #{tpu_custom_call.1} parent=0 // pred_check
    _
  $region15: #{tpu_custom_call.1} parent=0 // pred_check_branch
    %16 = sbr.rel (0) target = $region17
  $region16: #{tpu_custom_call.1} parent=0 // pred_region
    _
  $region17: #{tpu_custom_call.1} parent=0 // pred_fallthru
    _
  %v18 = vld [vmem:[%s0] sm:$0xf]
  %v19 = vld [vmem:[%s0 + $0x4] sm:$0x1]
  %v20 = vld [vmem:[%s1] sm:$0xf]
  %v21 = vld [vmem:[%s1 + $0x4] sm:$0xf]
  %v22 = vld [vmem:[%s2] sm:$0xf]
  %v23 = vld [vmem:[%s2 + $0x4] sm:$0x1]
  %v26 = vunpack.c.l.b16 %v18
  %v27 = vunpack.c.l.b16 %v19
  %v28 = vpack.c.b16 %v27, %v26
  %v31 = vunpack.c.l.b16 %v20
  %v32 = vunpack.c.l.b16 %v21
  %v33 = vpack.c.b16 %v32, %v31
  %vm35 = vcmask 130048
  %v37 = vsel %vm35, %v28, 0
  %39 = vmatpush.bf16.msra.mxu0 0
  %40 = vmatpush.bf16.msra.mxu0 0
  %41 = vmatpush.bf16.msra.mxu0 0
  %42 = vmatpush.bf16.msra.mxu0 0
  %43 = vmatpush.bf16.msra.mxu0 0
  %44 = vmatpush.bf16.msra.mxu0 0
  %45 = vmatpush.bf16.msra.mxu0 0
  %46 = vmatpush.bf16.msra.mxu0 %v33
  %47 = vmatmul.bf16.gmra.mxu0 %v37
  %v48 = vpop.f32.mrf.mxu0
  %v49 = vadd.f32 0.0, %v48
  %v50 = vpop.f32.mrf.mxu0
  %v51 = vadd.f32 0.0, %v50
  %52 = vdwg.mxu0
  %v53 = vmul.f32 %v49, 0.25
  %v54 = vmul.f32 %v51, 0.25
  %vm55 = vcmask 80896
  %v56 = vsel %vm55, %v53, -inf
  %57 = vmax.xlane.f32.xlu0 %v56
  %v58 = vpop.xlane.xlu0 %57
  %vm59 = vcmask 74752
  %v60 = vsel %vm59, %v54, -inf
  %61 = vmax.xlane.f32.xlu0 %v60
  %v62 = vpop.xlane.xlu0 %61
  %v63 = vsub.f32 %v53, %v58
  %v64 = vsub.f32 %v54, %v62
  %v65 = vmul.f32 %v63, 1.442695
  %v66 = vpow.pop %v65
  %v67 = vmul.f32 %v64, 1.442695
  %v68 = vpow.pop %v67
  %v69 = vld [vmem:[%s3] sm:$0xff]
  %v70 = vld [vmem:[%s3 + $0x8] sm:$0x3]
  %v71 = vmul.f32 %v66, %v69
  %v72 = vmul.f32 %v68, %v70
  %v73 = vsel %vm55, %v71, 0.0
  %74 = vadd.xlane.f32.xlu0 %v73
  %v75 = vpop.xlane.xlu0 %74
  %v76 = vsel %vm59, %v72, 0.0
  %77 = vadd.xlane.f32.xlu0 %v76
  %v78 = vpop.xlane.xlu0 %77
  %v79 = vpack.c.bf16 %v72, %v71
  %v82 = vunpack.c.l.b16 %v22
  %v83 = vunpack.c.l.b16 %v23
  %v84 = vpack.c.b16 %v83, %v82
  %v86 = vsel %vm55, %v79, 0
  %vm88 = vcmask 1044480
  %v90 = vsel %vm88, %v84, 0
  %92 = vmatpush.bf16.msra.mxu0 0
  %93 = vmatpush.bf16.msra.mxu0 0
  %94 = vmatpush.bf16.msra.mxu0 0
  %95 = vmatpush.bf16.msra.mxu0 0
  %96 = vmatpush.bf16.msra.mxu0 0
  %97 = vmatpush.bf16.msra.mxu0 0
  %98 = vmatpush.bf16.msra.mxu0 0
  %99 = vmatpush.bf16.msra.mxu0 %v90
  %100 = vmatmul.bf16.gmra.mxu0 %v86
  %v101 = vpop.f32.mrf.mxu0
  %v102 = vadd.f32 0.0, %v101
  %v103 = vpop.f32.mrf.mxu0
  %v104 = vadd.f32 0.0, %v103
  %105 = vdwg.mxu0
  %v106 = vrcp.pop %v75
  %v107 = vmul.f32 %v75, %v106
  %v108 = vsub.f32 1.0, %v107
  %v109 = vmul.f32 %v106, %v108
  %v110 = vadd.f32 %v106, %v109
  %vm111 = vweird.f32 %v75
  %vm112 = vweird.f32 %v106
  %vm113 = vmor %vm111, %vm112
  %v114 = vsel %vm113, %v106, %v110
  %v115 = vand.u32 2147483647, %v75
  %vm116 = vcmp.eq.f32.partialorder %v115, 8.507059e+37
  %v117 = vand.u32 %v75, 2147483648
  %v118 = vor.u32 1.1754944e-38, %v117
  %v119 = vsel %vm116, %v118, %v114
  %v120 = vmul.f32 %v102, %v119
  %v121 = vrcp.pop %v78
  %v122 = vmul.f32 %v78, %v121
  %v123 = vsub.f32 1.0, %v122
  %v124 = vmul.f32 %v121, %v123
  %v125 = vadd.f32 %v121, %v124
  %vm126 = vweird.f32 %v78
  %vm127 = vweird.f32 %v121
  %vm128 = vmor %vm126, %vm127
  %v129 = vsel %vm128, %v121, %v125
  %v130 = vand.u32 2147483647, %v78
  %vm131 = vcmp.eq.f32.partialorder %v130, 8.507059e+37
  %v132 = vand.u32 %v78, 2147483648
  %v133 = vor.u32 1.1754944e-38, %v132
  %v134 = vsel %vm131, %v133, %v129
  %v135 = vmul.f32 %v104, %v134
  %136 = vst.msk [vmem:[%s4] sm:$0xff] %vm35, %v120
  %vm137 = vcmask 123904
  %138 = vst.msk [vmem:[%s4 + $0x8] sm:$0x3] %vm137, %v135
  %s139 = scalar_lea.vmem %s0, 8
  %v140 = vld [vmem:[%s139] sm:$0xf]
  %v141 = vld [vmem:[%s139 + $0x4] sm:$0x1]
  %s142 = scalar_lea.vmem %s1, 8
  %v143 = vld [vmem:[%s142] sm:$0xf]
  %v144 = vld [vmem:[%s142 + $0x4] sm:$0xf]
  %s145 = scalar_lea.vmem %s2, 8
  %v146 = vld [vmem:[%s145] sm:$0xf]
  %v147 = vld [vmem:[%s145 + $0x4] sm:$0x1]
  %v150 = vunpack.c.l.b16 %v140
  %v151 = vunpack.c.l.b16 %v141
  %v152 = vpack.c.b16 %v151, %v150
  %v155 = vunpack.c.l.b16 %v143
  %v156 = vunpack.c.l.b16 %v144
  %v157 = vpack.c.b16 %v156, %v155
  %v160 = vsel %vm35, %v152, 0
  %162 = vmatpush.bf16.msra.mxu0 0
  %163 = vmatpush.bf16.msra.mxu0 0
  %164 = vmatpush.bf16.msra.mxu0 0
  %165 = vmatpush.bf16.msra.mxu0 0
  %166 = vmatpush.bf16.msra.mxu0 0
  %167 = vmatpush.bf16.msra.mxu0 0
  %168 = vmatpush.bf16.msra.mxu0 0
  %169 = vmatpush.bf16.msra.mxu0 %v157
  %170 = vmatmul.bf16.gmra.mxu0 %v160
  %v171 = vpop.f32.mrf.mxu0
  %v172 = vadd.f32 0.0, %v171
  %v173 = vpop.f32.mrf.mxu0
  %v174 = vadd.f32 0.0, %v173
  %175 = vdwg.mxu0
  %v176 = vmul.f32 %v172, 0.25
  %v177 = vmul.f32 %v174, 0.25
  %v178 = vsel %vm55, %v176, -inf
  %179 = vmax.xlane.f32.xlu0 %v178
  %v180 = vpop.xlane.xlu0 %179
  %v181 = vsel %vm59, %v177, -inf
  %182 = vmax.xlane.f32.xlu0 %v181
  %v183 = vpop.xlane.xlu0 %182
  %v184 = vsub.f32 %v176, %v180
  %v185 = vsub.f32 %v177, %v183
  %v186 = vmul.f32 %v184, 1.442695
  %v187 = vpow.pop %v186
  %v188 = vmul.f32 %v185, 1.442695
  %v189 = vpow.pop %v188
  %s190 = scalar_lea.vmem %s3, 16
  %v191 = vld [vmem:[%s190] sm:$0xff]
  %v192 = vld [vmem:[%s190 + $0x8] sm:$0x3]
  %v193 = vmul.f32 %v187, %v191
  %v194 = vmul.f32 %v189, %v192
  %v195 = vsel %vm55, %v193, 0.0
  %196 = vadd.xlane.f32.xlu0 %v195
  %v197 = vpop.xlane.xlu0 %196
  %v198 = vsel %vm59, %v194, 0.0
  %199 = vadd.xlane.f32.xlu0 %v198
  %v200 = vpop.xlane.xlu0 %199
  %v201 = vpack.c.bf16 %v194, %v193
  %v204 = vunpack.c.l.b16 %v146
  %v205 = vunpack.c.l.b16 %v147
  %v206 = vpack.c.b16 %v205, %v204
  %v208 = vsel %vm55, %v201, 0
  %v211 = vsel %vm88, %v206, 0
  %213 = vmatpush.bf16.msra.mxu0 0
  %214 = vmatpush.bf16.msra.mxu0 0
  %215 = vmatpush.bf16.msra.mxu0 0
  %216 = vmatpush.bf16.msra.mxu0 0
  %217 = vmatpush.bf16.msra.mxu0 0
  %218 = vmatpush.bf16.msra.mxu0 0
  %219 = vmatpush.bf16.msra.mxu0 0
  %220 = vmatpush.bf16.msra.mxu0 %v211
  %221 = vmatmul.bf16.gmra.mxu0 %v208
  %v222 = vpop.f32.mrf.mxu0
  %v223 = vadd.f32 0.0, %v222
  %v224 = vpop.f32.mrf.mxu0
  %v225 = vadd.f32 0.0, %v224
  %226 = vdwg.mxu0
  %v227 = vrcp.pop %v197
  %v228 = vmul.f32 %v197, %v227
  %v229 = vsub.f32 1.0, %v228
  %v230 = vmul.f32 %v227, %v229
  %v231 = vadd.f32 %v227, %v230
  %vm232 = vweird.f32 %v197
  %vm233 = vweird.f32 %v227
  %vm234 = vmor %vm232, %vm233
  %v235 = vsel %vm234, %v227, %v231
  %v236 = vand.u32 2147483647, %v197
  %vm237 = vcmp.eq.f32.partialorder %v236, 8.507059e+37
  %v238 = vand.u32 %v197, 2147483648
  %v239 = vor.u32 1.1754944e-38, %v238
  %v240 = vsel %vm237, %v239, %v235
  %v241 = vmul.f32 %v223, %v240
  %v242 = vrcp.pop %v200
  %v243 = vmul.f32 %v200, %v242
  %v244 = vsub.f32 1.0, %v243
  %v245 = vmul.f32 %v242, %v244
  %v246 = vadd.f32 %v242, %v245
  %vm247 = vweird.f32 %v200
  %vm248 = vweird.f32 %v242
  %vm249 = vmor %vm247, %vm248
  %v250 = vsel %vm249, %v242, %v246
  %v251 = vand.u32 2147483647, %v200
  %vm252 = vcmp.eq.f32.partialorder %v251, 8.507059e+37
  %v253 = vand.u32 %v200, 2147483648
  %v254 = vor.u32 1.1754944e-38, %v253
  %v255 = vsel %vm252, %v254, %v250
  %v256 = vmul.f32 %v225, %v255
  %259 = vrot.lane.b32.xlu0 %v241, 16
  %v260 = vpop.permute.xlu0 %259
  %261 = vrot.lane.b32.xlu0 %v256, 16
  %v262 = vpop.permute.xlu0 %261
  %vm265 = vcmask 261248
  %266 = vst.msk [vmem:[%s4] sm:$0xff] %vm265, %v260
  %vm267 = vcmask 255104
  %268 = vst.msk [vmem:[%s4 + $0x8] sm:$0x3] %vm267, %v262
  %s269 = scalar_lea.vmem %s0, 16
  %v270 = vld [vmem:[%s269] sm:$0xf]
  %v271 = vld [vmem:[%s269 + $0x4] sm:$0x1]
  %s272 = scalar_lea.vmem %s1, 16
  %v273 = vld [vmem:[%s272] sm:$0xf]
  %v274 = vld [vmem:[%s272 + $0x4] sm:$0xf]
  %s275 = scalar_lea.vmem %s2, 16
  %v276 = vld [vmem:[%s275] sm:$0xf]
  %v277 = vld [vmem:[%s275 + $0x4] sm:$0x1]
  %v280 = vunpack.c.l.b16 %v270
  %v281 = vunpack.c.l.b16 %v271
  %v282 = vpack.c.b16 %v281, %v280
  %v285 = vunpack.c.l.b16 %v273
  %v286 = vunpack.c.l.b16 %v274
  %v287 = vpack.c.b16 %v286, %v285
  %v290 = vsel %vm35, %v282, 0
  %292 = vmatpush.bf16.msra.mxu0 0
  %293 = vmatpush.bf16.msra.mxu0 0
  %294 = vmatpush.bf16.msra.mxu0 0
  %295 = vmatpush.bf16.msra.mxu0 0
  %296 = vmatpush.bf16.msra.mxu0 0
  %297 = vmatpush.bf16.msra.mxu0 0
  %298 = vmatpush.bf16.msra.mxu0 0
  %299 = vmatpush.bf16.msra.mxu0 %v287
  %300 = vmatmul.bf16.gmra.mxu0 %v290
  %v301 = vpop.f32.mrf.mxu0
  %v302 = vadd.f32 0.0, %v301
  %v303 = vpop.f32.mrf.mxu0
  %v304 = vadd.f32 0.0, %v303
  %305 = vdwg.mxu0
  %v306 = vmul.f32 %v302, 0.25
  %v307 = vmul.f32 %v304, 0.25
  %v308 = vsel %vm55, %v306, -inf
  %309 = vmax.xlane.f32.xlu0 %v308
  %v310 = vpop.xlane.xlu0 %309
  %v311 = vsel %vm59, %v307, -inf
  %312 = vmax.xlane.f32.xlu0 %v311
  %v313 = vpop.xlane.xlu0 %312
  %v314 = vsub.f32 %v306, %v310
  %v315 = vsub.f32 %v307, %v313
  %v316 = vmul.f32 %v314, 1.442695
  %v317 = vpow.pop %v316
  %v318 = vmul.f32 %v315, 1.442695
  %v319 = vpow.pop %v318
  %s320 = scalar_lea.vmem %s3, 32
  %v321 = vld [vmem:[%s320] sm:$0xff]
  %v322 = vld [vmem:[%s320 + $0x8] sm:$0x3]
  %v323 = vmul.f32 %v317, %v321
  %v324 = vmul.f32 %v319, %v322
  %v325 = vsel %vm55, %v323, 0.0
  %326 = vadd.xlane.f32.xlu0 %v325
  %v327 = vpop.xlane.xlu0 %326
  %v328 = vsel %vm59, %v324, 0.0
  %329 = vadd.xlane.f32.xlu0 %v328
  %v330 = vpop.xlane.xlu0 %329
  %v331 = vpack.c.bf16 %v324, %v323
  %v334 = vunpack.c.l.b16 %v276
  %v335 = vunpack.c.l.b16 %v277
  %v336 = vpack.c.b16 %v335, %v334
  %v338 = vsel %vm55, %v331, 0
  %v341 = vsel %vm88, %v336, 0
  %343 = vmatpush.bf16.msra.mxu0 0
  %344 = vmatpush.bf16.msra.mxu0 0
  %345 = vmatpush.bf16.msra.mxu0 0
  %346 = vmatpush.bf16.msra.mxu0 0
  %347 = vmatpush.bf16.msra.mxu0 0
  %348 = vmatpush.bf16.msra.mxu0 0
  %349 = vmatpush.bf16.msra.mxu0 0
  %350 = vmatpush.bf16.msra.mxu0 %v341
  %351 = vmatmul.bf16.gmra.mxu0 %v338
  %v352 = vpop.f32.mrf.mxu0
  %v353 = vadd.f32 0.0, %v352
  %v354 = vpop.f32.mrf.mxu0
  %v355 = vadd.f32 0.0, %v354
  %356 = vdwg.mxu0
  %v357 = vrcp.pop %v327
  %v358 = vmul.f32 %v327, %v357
  %v359 = vsub.f32 1.0, %v358
  %v360 = vmul.f32 %v357, %v359
  %v361 = vadd.f32 %v357, %v360
  %vm362 = vweird.f32 %v327
  %vm363 = vweird.f32 %v357
  %vm364 = vmor %vm362, %vm363
  %v365 = vsel %vm364, %v357, %v361
  %v366 = vand.u32 2147483647, %v327
  %vm367 = vcmp.eq.f32.partialorder %v366, 8.507059e+37
  %v368 = vand.u32 %v327, 2147483648
  %v369 = vor.u32 1.1754944e-38, %v368
  %v370 = vsel %vm367, %v369, %v365
  %v371 = vmul.f32 %v353, %v370
  %v372 = vrcp.pop %v330
  %v373 = vmul.f32 %v330, %v372
  %v374 = vsub.f32 1.0, %v373
  %v375 = vmul.f32 %v372, %v374
  %v376 = vadd.f32 %v372, %v375
  %vm377 = vweird.f32 %v330
  %vm378 = vweird.f32 %v372
  %vm379 = vmor %vm377, %vm378
  %v380 = vsel %vm379, %v372, %v376
  %v381 = vand.u32 2147483647, %v330
  %vm382 = vcmp.eq.f32.partialorder %v381, 8.507059e+37
  %v383 = vand.u32 %v330, 2147483648
  %v384 = vor.u32 1.1754944e-38, %v383
  %v385 = vsel %vm382, %v384, %v380
  %v386 = vmul.f32 %v355, %v385
  %389 = vrot.lane.b32.xlu0 %v371, 32
  %v390 = vpop.permute.xlu0 %389
  %391 = vrot.lane.b32.xlu0 %v386, 32
  %v392 = vpop.permute.xlu0 %391
  %vm395 = vcmask 392448
  %396 = vst.msk [vmem:[%s4] sm:$0xff] %vm395, %v390
  %vm397 = vcmask 386304
  %398 = vst.msk [vmem:[%s4 + $0x8] sm:$0x3] %vm397, %v392
  %s399 = scalar_lea.vmem %s0, 24
  %v400 = vld [vmem:[%s399] sm:$0xf]
  %v401 = vld [vmem:[%s399 + $0x4] sm:$0x1]
  %s402 = scalar_lea.vmem %s1, 24
  %v403 = vld [vmem:[%s402] sm:$0xf]
  %v404 = vld [vmem:[%s402 + $0x4] sm:$0xf]
  %s405 = scalar_lea.vmem %s2, 24
  %v406 = vld [vmem:[%s405] sm:$0xf]
  %v407 = vld [vmem:[%s405 + $0x4] sm:$0x1]
  %v410 = vunpack.c.l.b16 %v400
  %v411 = vunpack.c.l.b16 %v401
  %v412 = vpack.c.b16 %v411, %v410
  %v415 = vunpack.c.l.b16 %v403
  %v416 = vunpack.c.l.b16 %v404
  %v417 = vpack.c.b16 %v416, %v415
  %v420 = vsel %vm35, %v412, 0
  %422 = vmatpush.bf16.msra.mxu0 0
  %423 = vmatpush.bf16.msra.mxu0 0
  %424 = vmatpush.bf16.msra.mxu0 0
  %425 = vmatpush.bf16.msra.mxu0 0
  %426 = vmatpush.bf16.msra.mxu0 0
  %427 = vmatpush.bf16.msra.mxu0 0
  %428 = vmatpush.bf16.msra.mxu0 0
  %429 = vmatpush.bf16.msra.mxu0 %v417
  %430 = vmatmul.bf16.gmra.mxu0 %v420
  %v431 = vpop.f32.mrf.mxu0
  %v432 = vadd.f32 0.0, %v431
  %v433 = vpop.f32.mrf.mxu0
  %v434 = vadd.f32 0.0, %v433
  %435 = vdwg.mxu0
  %v436 = vmul.f32 %v432, 0.25
  %v437 = vmul.f32 %v434, 0.25
  %v438 = vsel %vm55, %v436, -inf
  %439 = vmax.xlane.f32.xlu0 %v438
  %v440 = vpop.xlane.xlu0 %439
  %v441 = vsel %vm59, %v437, -inf
  %442 = vmax.xlane.f32.xlu0 %v441
  %v443 = vpop.xlane.xlu0 %442
  %v444 = vsub.f32 %v436, %v440
  %v445 = vsub.f32 %v437, %v443
  %v446 = vmul.f32 %v444, 1.442695
  %v447 = vpow.pop %v446
  %v448 = vmul.f32 %v445, 1.442695
  %v449 = vpow.pop %v448
  %s450 = scalar_lea.vmem %s3, 48
  %v451 = vld [vmem:[%s450] sm:$0xff]
  %v452 = vld [vmem:[%s450 + $0x8] sm:$0x3]
  %v453 = vmul.f32 %v447, %v451
  %v454 = vmul.f32 %v449, %v452
  %v455 = vsel %vm55, %v453, 0.0
  %456 = vadd.xlane.f32.xlu0 %v455
  %v457 = vpop.xlane.xlu0 %456
  %v458 = vsel %vm59, %v454, 0.0
  %459 = vadd.xlane.f32.xlu0 %v458
  %v460 = vpop.xlane.xlu0 %459
  %v461 = vpack.c.bf16 %v454, %v453
  %v464 = vunpack.c.l.b16 %v406
  %v465 = vunpack.c.l.b16 %v407
  %v466 = vpack.c.b16 %v465, %v464
  %v468 = vsel %vm55, %v461, 0
  %v471 = vsel %vm88, %v466, 0
  %473 = vmatpush.bf16.msra.mxu0 0
  %474 = vmatpush.bf16.msra.mxu0 0
  %475 = vmatpush.bf16.msra.mxu0 0
  %476 = vmatpush.bf16.msra.mxu0 0
  %477 = vmatpush.bf16.msra.mxu0 0
  %478 = vmatpush.bf16.msra.mxu0 0
  %479 = vmatpush.bf16.msra.mxu0 0
  %480 = vmatpush.bf16.msra.mxu0 %v471
  %481 = vmatmul.bf16.gmra.mxu0 %v468
  %v482 = vpop.f32.mrf.mxu0
  %v483 = vadd.f32 0.0, %v482
  %v484 = vpop.f32.mrf.mxu0
  %v485 = vadd.f32 0.0, %v484
  %486 = vdwg.mxu0
  %v487 = vrcp.pop %v457
  %v488 = vmul.f32 %v457, %v487
  %v489 = vsub.f32 1.0, %v488
  %v490 = vmul.f32 %v487, %v489
  %v491 = vadd.f32 %v487, %v490
  %vm492 = vweird.f32 %v457
  %vm493 = vweird.f32 %v487
  %vm494 = vmor %vm492, %vm493
  %v495 = vsel %vm494, %v487, %v491
  %v496 = vand.u32 2147483647, %v457
  %vm497 = vcmp.eq.f32.partialorder %v496, 8.507059e+37
  %v498 = vand.u32 %v457, 2147483648
  %v499 = vor.u32 1.1754944e-38, %v498
  %v500 = vsel %vm497, %v499, %v495
  %v501 = vmul.f32 %v483, %v500
  %v502 = vrcp.pop %v460
  %v503 = vmul.f32 %v460, %v502
  %v504 = vsub.f32 1.0, %v503
  %v505 = vmul.f32 %v502, %v504
  %v506 = vadd.f32 %v502, %v505
  %vm507 = vweird.f32 %v460
  %vm508 = vweird.f32 %v502
  %vm509 = vmor %vm507, %vm508
  %v510 = vsel %vm509, %v502, %v506
  %v511 = vand.u32 2147483647, %v460
  %vm512 = vcmp.eq.f32.partialorder %v511, 8.507059e+37
  %v513 = vand.u32 %v460, 2147483648
  %v514 = vor.u32 1.1754944e-38, %v513
  %v515 = vsel %vm512, %v514, %v510
  %v516 = vmul.f32 %v485, %v515
  %519 = vrot.lane.b32.xlu0 %v501, 48
  %v520 = vpop.permute.xlu0 %519
  %521 = vrot.lane.b32.xlu0 %v516, 48
  %v522 = vpop.permute.xlu0 %521
  %vm525 = vcmask 523648
  %526 = vst.msk [vmem:[%s4] sm:$0xff] %vm525, %v520
  %vm527 = vcmask 517504
  %528 = vst.msk [vmem:[%s4 + $0x8] sm:$0x3] %vm527, %v522
  %s529 = scalar_lea.vmem %s0, 32
  %v530 = vld [vmem:[%s529] sm:$0xf]
  %v531 = vld [vmem:[%s529 + $0x4] sm:$0x1]
  %s532 = scalar_lea.vmem %s1, 32
  %v533 = vld [vmem:[%s532] sm:$0xf]
  %v534 = vld [vmem:[%s532 + $0x4] sm:$0xf]
  %s535 = scalar_lea.vmem %s2, 32
  %v536 = vld [vmem:[%s535] sm:$0xf]
  %v537 = vld [vmem:[%s535 + $0x4] sm:$0x1]
  %v540 = vunpack.c.l.b16 %v530
  %v541 = vunpack.c.l.b16 %v531
  %v542 = vpack.c.b16 %v541, %v540
  %v545 = vunpack.c.l.b16 %v533
  %v546 = vunpack.c.l.b16 %v534
  %v547 = vpack.c.b16 %v546, %v545
  %v550 = vsel %vm35, %v542, 0
  %552 = vmatpush.bf16.msra.mxu0 0
  %553 = vmatpush.bf16.msra.mxu0 0
  %554 = vmatpush.bf16.msra.mxu0 0
  %555 = vmatpush.bf16.msra.mxu0 0
  %556 = vmatpush.bf16.msra.mxu0 0
  %557 = vmatpush.bf16.msra.mxu0 0
  %558 = vmatpush.bf16.msra.mxu0 0
  %559 = vmatpush.bf16.msra.mxu0 %v547
  %560 = vmatmul.bf16.gmra.mxu0 %v550
  %v561 = vpop.f32.mrf.mxu0
  %v562 = vadd.f32 0.0, %v561
  %v563 = vpop.f32.mrf.mxu0
  %v564 = vadd.f32 0.0, %v563
  %565 = vdwg.mxu0
  %v566 = vmul.f32 %v562, 0.25
  %v567 = vmul.f32 %v564, 0.25
  %v568 = vsel %vm55, %v566, -inf
  %569 = vmax.xlane.f32.xlu0 %v568
  %v570 = vpop.xlane.xlu0 %569
  %v571 = vsel %vm59, %v567, -inf
  %572 = vmax.xlane.f32.xlu0 %v571
  %v573 = vpop.xlane.xlu0 %572
  %v574 = vsub.f32 %v566, %v570
  %v575 = vsub.f32 %v567, %v573
  %v576 = vmul.f32 %v574, 1.442695
  %v577 = vpow.pop %v576
  %v578 = vmul.f32 %v575, 1.442695
  %v579 = vpow.pop %v578
  %s580 = scalar_lea.vmem %s3, 64
  %v581 = vld [vmem:[%s580] sm:$0xff]
  %v582 = vld [vmem:[%s580 + $0x8] sm:$0x3]
  %v583 = vmul.f32 %v577, %v581
  %v584 = vmul.f32 %v579, %v582
  %v585 = vsel %vm55, %v583, 0.0
  %586 = vadd.xlane.f32.xlu0 %v585
  %v587 = vpop.xlane.xlu0 %586
  %v588 = vsel %vm59, %v584, 0.0
  %589 = vadd.xlane.f32.xlu0 %v588
  %v590 = vpop.xlane.xlu0 %589
  %v591 = vpack.c.bf16 %v584, %v583
  %v594 = vunpack.c.l.b16 %v536
  %v595 = vunpack.c.l.b16 %v537
  %v596 = vpack.c.b16 %v595, %v594
  %v598 = vsel %vm55, %v591, 0
  %v601 = vsel %vm88, %v596, 0
  %603 = vmatpush.bf16.msra.mxu0 0
  %604 = vmatpush.bf16.msra.mxu0 0
  %605 = vmatpush.bf16.msra.mxu0 0
  %606 = vmatpush.bf16.msra.mxu0 0
  %607 = vmatpush.bf16.msra.mxu0 0
  %608 = vmatpush.bf16.msra.mxu0 0
  %609 = vmatpush.bf16.msra.mxu0 0
  %610 = vmatpush.bf16.msra.mxu0 %v601
  %611 = vmatmul.bf16.gmra.mxu0 %v598
  %v612 = vpop.f32.mrf.mxu0
  %v613 = vadd.f32 0.0, %v612
  %v614 = vpop.f32.mrf.mxu0
  %v615 = vadd.f32 0.0, %v614
  %616 = vdwg.mxu0
  %v617 = vrcp.pop %v587
  %v618 = vmul.f32 %v587, %v617
  %v619 = vsub.f32 1.0, %v618
  %v620 = vmul.f32 %v617, %v619
  %v621 = vadd.f32 %v617, %v620
  %vm622 = vweird.f32 %v587
  %vm623 = vweird.f32 %v617
  %vm624 = vmor %vm622, %vm623
  %v625 = vsel %vm624, %v617, %v621
  %v626 = vand.u32 2147483647, %v587
  %vm627 = vcmp.eq.f32.partialorder %v626, 8.507059e+37
  %v628 = vand.u32 %v587, 2147483648
  %v629 = vor.u32 1.1754944e-38, %v628
  %v630 = vsel %vm627, %v629, %v625
  %v631 = vmul.f32 %v613, %v630
  %v632 = vrcp.pop %v590
  %v633 = vmul.f32 %v590, %v632
  %v634 = vsub.f32 1.0, %v633
  %v635 = vmul.f32 %v632, %v634
  %v636 = vadd.f32 %v632, %v635
  %vm637 = vweird.f32 %v590
  %vm638 = vweird.f32 %v632
  %vm639 = vmor %vm637, %vm638
  %v640 = vsel %vm639, %v632, %v636
  %v641 = vand.u32 2147483647, %v590
  %vm642 = vcmp.eq.f32.partialorder %v641, 8.507059e+37
  %v643 = vand.u32 %v590, 2147483648
  %v644 = vor.u32 1.1754944e-38, %v643
  %v645 = vsel %vm642, %v644, %v640
  %v646 = vmul.f32 %v615, %v645
  %s647 = scalar_lea.vmem %s4, 16
  %648 = vst.msk [vmem:[%s647] sm:$0xff] %vm35, %v631
  %649 = vst.msk [vmem:[%s647 + $0x8] sm:$0x3] %vm137, %v646
  %s650 = scalar_lea.vmem %s0, 40
  %v651 = vld [vmem:[%s650] sm:$0xf]
  %v652 = vld [vmem:[%s650 + $0x4] sm:$0x1]
  %s653 = scalar_lea.vmem %s1, 40
  %v654 = vld [vmem:[%s653] sm:$0xf]
  %v655 = vld [vmem:[%s653 + $0x4] sm:$0xf]
  %s656 = scalar_lea.vmem %s2, 40
  %v657 = vld [vmem:[%s656] sm:$0xf]
  %v658 = vld [vmem:[%s656 + $0x4] sm:$0x1]
  %v661 = vunpack.c.l.b16 %v651
  %v662 = vunpack.c.l.b16 %v652
  %v663 = vpack.c.b16 %v662, %v661
  %v666 = vunpack.c.l.b16 %v654
  %v667 = vunpack.c.l.b16 %v655
  %v668 = vpack.c.b16 %v667, %v666
  %v671 = vsel %vm35, %v663, 0
  %673 = vmatpush.bf16.msra.mxu0 0
  %674 = vmatpush.bf16.msra.mxu0 0
  %675 = vmatpush.bf16.msra.mxu0 0
  %676 = vmatpush.bf16.msra.mxu0 0
  %677 = vmatpush.bf16.msra.mxu0 0
  %678 = vmatpush.bf16.msra.mxu0 0
  %679 = vmatpush.bf16.msra.mxu0 0
  %680 = vmatpush.bf16.msra.mxu0 %v668
  %681 = vmatmul.bf16.gmra.mxu0 %v671
  %v682 = vpop.f32.mrf.mxu0
  %v683 = vadd.f32 0.0, %v682
  %v684 = vpop.f32.mrf.mxu0
  %v685 = vadd.f32 0.0, %v684
  %686 = vdwg.mxu0
  %v687 = vmul.f32 %v683, 0.25
  %v688 = vmul.f32 %v685, 0.25
  %v689 = vsel %vm55, %v687, -inf
  %690 = vmax.xlane.f32.xlu0 %v689
  %v691 = vpop.xlane.xlu0 %690
  %v692 = vsel %vm59, %v688, -inf
  %693 = vmax.xlane.f32.xlu0 %v692
  %v694 = vpop.xlane.xlu0 %693
  %v695 = vsub.f32 %v687, %v691
  %v696 = vsub.f32 %v688, %v694
  %v697 = vmul.f32 %v695, 1.442695
  %v698 = vpow.pop %v697
  %v699 = vmul.f32 %v696, 1.442695
  %v700 = vpow.pop %v699
  %s701 = scalar_lea.vmem %s3, 80
  %v702 = vld [vmem:[%s701] sm:$0xff]
  %v703 = vld [vmem:[%s701 + $0x8] sm:$0x3]
  %v704 = vmul.f32 %v698, %v702
  %v705 = vmul.f32 %v700, %v703
  %v706 = vsel %vm55, %v704, 0.0
  %707 = vadd.xlane.f32.xlu0 %v706
  %v708 = vpop.xlane.xlu0 %707
  %v709 = vsel %vm59, %v705, 0.0
  %710 = vadd.xlane.f32.xlu0 %v709
  %v711 = vpop.xlane.xlu0 %710
  %v712 = vpack.c.bf16 %v705, %v704
  %v715 = vunpack.c.l.b16 %v657
  %v716 = vunpack.c.l.b16 %v658
  %v717 = vpack.c.b16 %v716, %v715
  %v719 = vsel %vm55, %v712, 0
  %v722 = vsel %vm88, %v717, 0
  %724 = vmatpush.bf16.msra.mxu0 0
  %725 = vmatpush.bf16.msra.mxu0 0
  %726 = vmatpush.bf16.msra.mxu0 0
  %727 = vmatpush.bf16.msra.mxu0 0
  %728 = vmatpush.bf16.msra.mxu0 0
  %729 = vmatpush.bf16.msra.mxu0 0
  %730 = vmatpush.bf16.msra.mxu0 0
  %731 = vmatpush.bf16.msra.mxu0 %v722
  %732 = vmatmul.bf16.gmra.mxu0 %v719
  %v733 = vpop.f32.mrf.mxu0
  %v734 = vadd.f32 0.0, %v733
  %v735 = vpop.f32.mrf.mxu0
  %v736 = vadd.f32 0.0, %v735
  %737 = vdwg.mxu0
  %v738 = vrcp.pop %v708
  %v739 = vmul.f32 %v708, %v738
  %v740 = vsub.f32 1.0, %v739
  %v741 = vmul.f32 %v738, %v740
  %v742 = vadd.f32 %v738, %v741
  %vm743 = vweird.f32 %v708
  %vm744 = vweird.f32 %v738
  %vm745 = vmor %vm743, %vm744
  %v746 = vsel %vm745, %v738, %v742
  %v747 = vand.u32 2147483647, %v708
  %vm748 = vcmp.eq.f32.partialorder %v747, 8.507059e+37
  %v749 = vand.u32 %v708, 2147483648
  %v750 = vor.u32 1.1754944e-38, %v749
  %v751 = vsel %vm748, %v750, %v746
  %v752 = vmul.f32 %v734, %v751
  %v753 = vrcp.pop %v711
  %v754 = vmul.f32 %v711, %v753
  %v755 = vsub.f32 1.0, %v754
  %v756 = vmul.f32 %v753, %v755
  %v757 = vadd.f32 %v753, %v756
  %vm758 = vweird.f32 %v711
  %vm759 = vweird.f32 %v753
  %vm760 = vmor %vm758, %vm759
  %v761 = vsel %vm760, %v753, %v757
  %v762 = vand.u32 2147483647, %v711
  %vm763 = vcmp.eq.f32.partialorder %v762, 8.507059e+37
  %v764 = vand.u32 %v711, 2147483648
  %v765 = vor.u32 1.1754944e-38, %v764
  %v766 = vsel %vm763, %v765, %v761
  %v767 = vmul.f32 %v736, %v766
  %770 = vrot.lane.b32.xlu0 %v752, 16
  %v771 = vpop.permute.xlu0 %770
  %772 = vrot.lane.b32.xlu0 %v767, 16
  %v773 = vpop.permute.xlu0 %772
  %776 = vst.msk [vmem:[%s647] sm:$0xff] %vm265, %v771
  %777 = vst.msk [vmem:[%s647 + $0x8] sm:$0x3] %vm267, %v773
  %s778 = scalar_lea.vmem %s0, 48
  %v779 = vld [vmem:[%s778] sm:$0xf]
  %v780 = vld [vmem:[%s778 + $0x4] sm:$0x1]
  %s781 = scalar_lea.vmem %s1, 48
  %v782 = vld [vmem:[%s781] sm:$0xf]
  %v783 = vld [vmem:[%s781 + $0x4] sm:$0xf]
  %s784 = scalar_lea.vmem %s2, 48
  %v785 = vld [vmem:[%s784] sm:$0xf]
  %v786 = vld [vmem:[%s784 + $0x4] sm:$0x1]
  %v789 = vunpack.c.l.b16 %v779
  %v790 = vunpack.c.l.b16 %v780
  %v791 = vpack.c.b16 %v790, %v789
  %v794 = vunpack.c.l.b16 %v782
  %v795 = vunpack.c.l.b16 %v783
  %v796 = vpack.c.b16 %v795, %v794
  %v799 = vsel %vm35, %v791, 0
  %801 = vmatpush.bf16.msra.mxu0 0
  %802 = vmatpush.bf16.msra.mxu0 0
  %803 = vmatpush.bf16.msra.mxu0 0
  %804 = vmatpush.bf16.msra.mxu0 0
  %805 = vmatpush.bf16.msra.mxu0 0
  %806 = vmatpush.bf16.msra.mxu0 0
  %807 = vmatpush.bf16.msra.mxu0 0
  %808 = vmatpush.bf16.msra.mxu0 %v796
  %809 = vmatmul.bf16.gmra.mxu0 %v799
  %v810 = vpop.f32.mrf.mxu0
  %v811 = vadd.f32 0.0, %v810
  %v812 = vpop.f32.mrf.mxu0
  %v813 = vadd.f32 0.0, %v812
  %814 = vdwg.mxu0
  %v815 = vmul.f32 %v811, 0.25
  %v816 = vmul.f32 %v813, 0.25
  %v817 = vsel %vm55, %v815, -inf
  %818 = vmax.xlane.f32.xlu0 %v817
  %v819 = vpop.xlane.xlu0 %818
  %v820 = vsel %vm59, %v816, -inf
  %821 = vmax.xlane.f32.xlu0 %v820
  %v822 = vpop.xlane.xlu0 %821
  %v823 = vsub.f32 %v815, %v819
  %v824 = vsub.f32 %v816, %v822
  %v825 = vmul.f32 %v823, 1.442695
  %v826 = vpow.pop %v825
  %v827 = vmul.f32 %v824, 1.442695
  %v828 = vpow.pop %v827
  %s829 = scalar_lea.vmem %s3, 96
  %v830 = vld [vmem:[%s829] sm:$0xff]
  %v831 = vld [vmem:[%s829 + $0x8] sm:$0x3]
  %v832 = vmul.f32 %v826, %v830
  %v833 = vmul.f32 %v828, %v831
  %v834 = vsel %vm55, %v832, 0.0
  %835 = vadd.xlane.f32.xlu0 %v834
  %v836 = vpop.xlane.xlu0 %835
  %v837 = vsel %vm59, %v833, 0.0
  %838 = vadd.xlane.f32.xlu0 %v837
  %v839 = vpop.xlane.xlu0 %838
  %v840 = vpack.c.bf16 %v833, %v832
  %v843 = vunpack.c.l.b16 %v785
  %v844 = vunpack.c.l.b16 %v786
  %v845 = vpack.c.b16 %v844, %v843
  %v847 = vsel %vm55, %v840, 0
  %v850 = vsel %vm88, %v845, 0
  %852 = vmatpush.bf16.msra.mxu0 0
  %853 = vmatpush.bf16.msra.mxu0 0
  %854 = vmatpush.bf16.msra.mxu0 0
  %855 = vmatpush.bf16.msra.mxu0 0
  %856 = vmatpush.bf16.msra.mxu0 0
  %857 = vmatpush.bf16.msra.mxu0 0
  %858 = vmatpush.bf16.msra.mxu0 0
  %859 = vmatpush.bf16.msra.mxu0 %v850
  %860 = vmatmul.bf16.gmra.mxu0 %v847
  %v861 = vpop.f32.mrf.mxu0
  %v862 = vadd.f32 0.0, %v861
  %v863 = vpop.f32.mrf.mxu0
  %v864 = vadd.f32 0.0, %v863
  %865 = vdwg.mxu0
  %v866 = vrcp.pop %v836
  %v867 = vmul.f32 %v836, %v866
  %v868 = vsub.f32 1.0, %v867
  %v869 = vmul.f32 %v866, %v868
  %v870 = vadd.f32 %v866, %v869
  %vm871 = vweird.f32 %v836
  %vm872 = vweird.f32 %v866
  %vm873 = vmor %vm871, %vm872
  %v874 = vsel %vm873, %v866, %v870
  %v875 = vand.u32 2147483647, %v836
  %vm876 = vcmp.eq.f32.partialorder %v875, 8.507059e+37
  %v877 = vand.u32 %v836, 2147483648
  %v878 = vor.u32 1.1754944e-38, %v877
  %v879 = vsel %vm876, %v878, %v874
  %v880 = vmul.f32 %v862, %v879
  %v881 = vrcp.pop %v839
  %v882 = vmul.f32 %v839, %v881
  %v883 = vsub.f32 1.0, %v882
  %v884 = vmul.f32 %v881, %v883
  %v885 = vadd.f32 %v881, %v884
  %vm886 = vweird.f32 %v839
  %vm887 = vweird.f32 %v881
  %vm888 = vmor %vm886, %vm887
  %v889 = vsel %vm888, %v881, %v885
  %v890 = vand.u32 2147483647, %v839
  %vm891 = vcmp.eq.f32.partialorder %v890, 8.507059e+37
  %v892 = vand.u32 %v839, 2147483648
  %v893 = vor.u32 1.1754944e-38, %v892
  %v894 = vsel %vm891, %v893, %v889
  %v895 = vmul.f32 %v864, %v894
  %898 = vrot.lane.b32.xlu0 %v880, 32
  %v899 = vpop.permute.xlu0 %898
  %900 = vrot.lane.b32.xlu0 %v895, 32
  %v901 = vpop.permute.xlu0 %900
  %904 = vst.msk [vmem:[%s647] sm:$0xff] %vm395, %v899
  %905 = vst.msk [vmem:[%s647 + $0x8] sm:$0x3] %vm397, %v901
  %s906 = scalar_lea.vmem %s0, 56
  %v907 = vld [vmem:[%s906] sm:$0xf]
  %v908 = vld [vmem:[%s906 + $0x4] sm:$0x1]
  %s909 = scalar_lea.vmem %s1, 56
  %v910 = vld [vmem:[%s909] sm:$0xf]
  %v911 = vld [vmem:[%s909 + $0x4] sm:$0xf]
  %s912 = scalar_lea.vmem %s2, 56
  %v913 = vld [vmem:[%s912] sm:$0xf]
  %v914 = vld [vmem:[%s912 + $0x4] sm:$0x1]
  %v917 = vunpack.c.l.b16 %v907
  %v918 = vunpack.c.l.b16 %v908
  %v919 = vpack.c.b16 %v918, %v917
  %v922 = vunpack.c.l.b16 %v910
  %v923 = vunpack.c.l.b16 %v911
  %v924 = vpack.c.b16 %v923, %v922
  %v927 = vsel %vm35, %v919, 0
  %929 = vmatpush.bf16.msra.mxu0 0
  %930 = vmatpush.bf16.msra.mxu0 0
  %931 = vmatpush.bf16.msra.mxu0 0
  %932 = vmatpush.bf16.msra.mxu0 0
  %933 = vmatpush.bf16.msra.mxu0 0
  %934 = vmatpush.bf16.msra.mxu0 0
  %935 = vmatpush.bf16.msra.mxu0 0
  %936 = vmatpush.bf16.msra.mxu0 %v924
  %937 = vmatmul.bf16.gmra.mxu0 %v927
  %v938 = vpop.f32.mrf.mxu0
  %v939 = vadd.f32 0.0, %v938
  %v940 = vpop.f32.mrf.mxu0
  %v941 = vadd.f32 0.0, %v940
  %942 = vdwg.mxu0
  %v943 = vmul.f32 %v939, 0.25
  %v944 = vmul.f32 %v941, 0.25
  %v945 = vsel %vm55, %v943, -inf
  %946 = vmax.xlane.f32.xlu0 %v945
  %v947 = vpop.xlane.xlu0 %946
  %v948 = vsel %vm59, %v944, -inf
  %949 = vmax.xlane.f32.xlu0 %v948
  %v950 = vpop.xlane.xlu0 %949
  %v951 = vsub.f32 %v943, %v947
  %v952 = vsub.f32 %v944, %v950
  %v953 = vmul.f32 %v951, 1.442695
  %v954 = vpow.pop %v953
  %v955 = vmul.f32 %v952, 1.442695
  %v956 = vpow.pop %v955
  %s957 = scalar_lea.vmem %s3, 112
  %v958 = vld [vmem:[%s957] sm:$0xff]
  %v959 = vld [vmem:[%s957 + $0x8] sm:$0x3]
  %v960 = vmul.f32 %v954, %v958
  %v961 = vmul.f32 %v956, %v959
  %v962 = vsel %vm55, %v960, 0.0
  %963 = vadd.xlane.f32.xlu0 %v962
  %v964 = vpop.xlane.xlu0 %963
  %v965 = vsel %vm59, %v961, 0.0
  %966 = vadd.xlane.f32.xlu0 %v965
  %v967 = vpop.xlane.xlu0 %966
  %v968 = vpack.c.bf16 %v961, %v960
  %v971 = vunpack.c.l.b16 %v913
  %v972 = vunpack.c.l.b16 %v914
  %v973 = vpack.c.b16 %v972, %v971
  %v975 = vsel %vm55, %v968, 0
  %v978 = vsel %vm88, %v973, 0
  %980 = vmatpush.bf16.msra.mxu0 0
  %981 = vmatpush.bf16.msra.mxu0 0
  %982 = vmatpush.bf16.msra.mxu0 0
  %983 = vmatpush.bf16.msra.mxu0 0
  %984 = vmatpush.bf16.msra.mxu0 0
  %985 = vmatpush.bf16.msra.mxu0 0
  %986 = vmatpush.bf16.msra.mxu0 0
  %987 = vmatpush.bf16.msra.mxu0 %v978
  %988 = vmatmul.bf16.gmra.mxu0 %v975
  %v989 = vpop.f32.mrf.mxu0
  %v990 = vadd.f32 0.0, %v989
  %v991 = vpop.f32.mrf.mxu0
  %v992 = vadd.f32 0.0, %v991
  %993 = vdwg.mxu0
  %v994 = vrcp.pop %v964
  %v995 = vmul.f32 %v964, %v994
  %v996 = vsub.f32 1.0, %v995
  %v997 = vmul.f32 %v994, %v996
  %v998 = vadd.f32 %v994, %v997
  %vm999 = vweird.f32 %v964
  %vm1000 = vweird.f32 %v994
  %vm1001 = vmor %vm999, %vm1000
  %v1002 = vsel %vm1001, %v994, %v998
  %v1003 = vand.u32 2147483647, %v964
  %vm1004 = vcmp.eq.f32.partialorder %v1003, 8.507059e+37
  %v1005 = vand.u32 %v964, 2147483648
  %v1006 = vor.u32 1.1754944e-38, %v1005
  %v1007 = vsel %vm1004, %v1006, %v1002
  %v1008 = vmul.f32 %v990, %v1007
  %v1009 = vrcp.pop %v967
  %v1010 = vmul.f32 %v967, %v1009
  %v1011 = vsub.f32 1.0, %v1010
  %v1012 = vmul.f32 %v1009, %v1011
  %v1013 = vadd.f32 %v1009, %v1012
  %vm1014 = vweird.f32 %v967
  %vm1015 = vweird.f32 %v1009
  %vm1016 = vmor %vm1014, %vm1015
  %v1017 = vsel %vm1016, %v1009, %v1013
  %v1018 = vand.u32 2147483647, %v967
  %vm1019 = vcmp.eq.f32.partialorder %v1018, 8.507059e+37
  %v1020 = vand.u32 %v967, 2147483648
  %v1021 = vor.u32 1.1754944e-38, %v1020
  %v1022 = vsel %vm1019, %v1021, %v1017
  %v1023 = vmul.f32 %v992, %v1022
  %1026 = vrot.lane.b32.xlu0 %v1008, 48
  %v1027 = vpop.permute.xlu0 %1026
  %1028 = vrot.lane.b32.xlu0 %v1023, 48
  %v1029 = vpop.permute.xlu0 %1028
  %1032 = vst.msk [vmem:[%s647] sm:$0xff] %vm525, %v1027
  %1033 = vst.msk [vmem:[%s647 + $0x8] sm:$0x3] %vm527, %v1029
  // Predicated region
  $region18: #{tpu_custom_call.1} parent=0 // pred_check
    _
  $region19: #{tpu_custom_call.1} parent=0 // pred_check_branch
    %1035 = sbr.rel (0) target = $region21
  $region20: #{tpu_custom_call.1} parent=0 // pred_region
    _
  $region21: #{tpu_custom_call.1} parent=0 // pred_fallthru
    _
  // Predicated region
  $region22: #{tpu_custom_call.1} parent=0 // pred_check
    _
  $region23: #{tpu_custom_call.1} parent=0 // pred_check_branch
    %1037 = sbr.rel (0) target = $region25
  $region24: #{tpu_custom_call.1} parent=0 // pred_region
    _
  $region25: #{tpu_custom_call.1} parent=0 // pred_fallthru
    _

</llo_original>
